<compile_context>
chip_gen: v6e
topology: v6e:2x2x1
jax: 0.10.0
libtpu: 0.0.40
codegen_flags: <defaults>
</compile_context>

<pallas_src>
import math

import numpy as np
import jax
import jax.numpy as jnp
from jax.experimental import pallas as pl
from jax.experimental.pallas import tpu as pltpu

NEG = -1.0e30  # padding fill: relu(NEG + bias) == 0 exactly; never wins the h0 max-pool


# ---------------------------------------------------------------------------
# Fused bidirectional-GRU kernel (molecule-block grid, fwd+bwd fused per step).
# ---------------------------------------------------------------------------
def _bigru_pallas(hid, rbias, wi_all, wh_blk, bias2, *, T, B_pad, B_TILE, H,
                  vmem_limit_bytes):
    TBt = T * B_TILE
    unroll_rec = T if T <= 8 else 2     # cap unroll for long sequences (vreg pressure)
    unroll_h0 = T if T <= 8 else 4

    def kernel(hid_ref, rbias_ref, wi_ref, wh_ref, b_ref, out_ref,
               gi_f_scr, gi_b_scr):
        f32 = jnp.float32

        # message = relu(node + bias); NEG-filled padded timesteps become exactly 0.
        msg = jnp.maximum(hid_ref[...] + rbias_ref[...], 0.0)       # (T, Bt, H)
        msg2 = msg.reshape(TBt, H)

        # ---- hoisted input projection: ONE fused MXU matmul for all 6 gate blocks ----
        # column layout of wi_all / proj: [f_r | f_z | f_n | b_r | b_z | b_n]
        proj = jnp.dot(msg2.astype(jnp.bfloat16), wi_ref[...],
                       preferred_element_type=f32) + b_ref[0:1, :]  # (TBt, 6H)
        gi_f_scr[...] = proj[:, 0:3 * H]
        gi_b_scr[...] = proj[:, 3 * H:6 * H]

        # ---- h0: per-molecule max over real atoms (NEG padding never wins) ----------
        def h0_body(t, acc):
            return jnp.maximum(acc, hid_ref[t])

        h0 = jax.lax.fori_loop(0, T, h0_body,
                               jnp.full((B_TILE, H), NEG, f32), unroll=unroll_h0)

        wh = wh_ref[...]        # (2H, 6H) block-diag: rows 0:H -> fwd, rows H:2H -> bwd
        ghb = b_ref[1:2, :]     # (1, 6H): [0, 0, bhn_f, 0, 0, bhn_b]

        # ---- fused fwd + bwd recurrence: one hidden matmul per timestep --------------
        def step(t, carry):
            h_f, h_b = carry
            tb = T - 1 - t
            gh = jnp.dot(jnp.concatenate([h_f, h_b], axis=1), wh,
                         preferred_element_type=f32) + ghb          # (Bt, 6H)

            rf = pl.multiple_of(t * B_TILE, B_TILE)
            rb = pl.multiple_of(tb * B_TILE, B_TILE)
            gif = gi_f_scr[pl.ds(rf, B_TILE), :]                     # fwd gates @ t
            gib = gi_b_scr[pl.ds(rb, B_TILE), :]                     # bwd gates @ T-1-t

            r_f = jax.nn.sigmoid(gif[:, 0:H] + gh[:, 0:H])
            z_f = jax.nn.sigmoid(gif[:, H:2 * H] + gh[:, H:2 * H])
            n_f = jnp.tanh(gif[:, 2 * H:3 * H] + r_f * gh[:, 2 * H:3 * H])
            h_f = (1.0 - z_f) * n_f + z_f * h_f

            r_b = jax.nn.sigmoid(gib[:, 0:H] + gh[:, 3 * H:4 * H])
            z_b = jax.nn.sigmoid(gib[:, H:2 * H] + gh[:, 4 * H:5 * H])
            n_b = jnp.tanh(gib[:, 2 * H:3 * H] + r_b * gh[:, 5 * H:6 * H])
            h_b = (1.0 - z_b) * n_b + z_b * h_b

            # direct stores into the output block (no of/ob scratch, no final copy)
            out_ref[t, :, 0:H] = h_f
            out_ref[tb, :, H:2 * H] = h_b
            return (h_f, h_b)

        jax.lax.fori_loop(0, T, step, (h0, h0), unroll=unroll_rec)

    n_blocks = B_pad // B_TILE
    flops = 2 * T * B_pad * H * 6 * H + 2 * T * B_pad * 2 * H * 6 * H
    transcendentals = 6 * T * B_pad * H
    bytes_accessed = (4 * T * B_pad * H + 4 * T * B_pad * 2 * H
                      + 2 * H * 6 * H + 4 * 2 * H * 6 * H + 4 * (H + 12 * H))

    return pl.pallas_call(
        kernel,
        out_shape=jax.ShapeDtypeStruct((T, B_pad, 2 * H), jnp.float32),
        grid=(n_blocks,),
        in_specs=[pl.BlockSpec((T, B_TILE, H), lambda i: (0, i, 0)),
                  pl.BlockSpec((1, H), lambda i: (0, 0)),
                  pl.BlockSpec((H, 6 * H), lambda i: (0, 0)),
                  pl.BlockSpec((2 * H, 6 * H), lambda i: (0, 0)),
                  pl.BlockSpec((2, 6 * H), lambda i: (0, 0))],
        out_specs=pl.BlockSpec((T, B_TILE, 2 * H), lambda i: (0, i, 0)),
        scratch_shapes=[pltpu.VMEM((TBt, 3 * H), jnp.float32),
                        pltpu.VMEM((TBt, 3 * H), jnp.float32)],
        compiler_params=pltpu.CompilerParams(
            dimension_semantics=("parallel",),
            vmem_limit_bytes=vmem_limit_bytes),
        cost_estimate=pl.CostEstimate(flops=flops,
                                      transcendentals=transcendentals,
                                      bytes_accessed=bytes_accessed),
    )(hid, rbias, wi_all, wh_blk, bias2)


# ---------------------------------------------------------------------------
# Host-side weight prep: fused projection weight (H, 6H), combined bias rows,
# and block-diagonal hidden weight (2H, 6H).  Gate order is (r, z, n), PyTorch.
# ---------------------------------------------------------------------------
def _prep_params(gru_params, H):
    wif, whf, bif, bhf, wib, whb, bib, bhb = gru_params

    # fused input projection weight: [f_r | f_z | f_n | b_r | b_z | b_n], bf16 operands
    wi_all = jnp.concatenate([wif, wib], axis=1).astype(jnp.bfloat16)      # (H, 6H)

    # input-side bias row: r/z columns get (bi + bh), n columns get bi only
    def bi_row(bi, bh):
        return jnp.concatenate([bi[:, :2 * H] + bh[:, :2 * H], bi[:, 2 * H:]], axis=1)

    gi_bias = jnp.concatenate([bi_row(bif, bhf), bi_row(bib, bhb)], axis=1)  # (1, 6H)

    # block-diagonal hidden weight: rows 0:H act on h_f, rows H:2H act on h_b
    z = jnp.zeros((H, 3 * H), jnp.float32)
    wh_blk = jnp.concatenate([jnp.concatenate([whf, z], axis=1),
                              jnp.concatenate([z, whb], axis=1)], axis=0)    # (2H, 6H)

    # hidden-side bias row: only the n columns carry bh_n (applied inside r * (...))
    z2 = jnp.zeros((1, 2 * H), jnp.float32)
    gh_bias = jnp.concatenate([z2, bhf[:, 2 * H:], z2, bhb[:, 2 * H:]], axis=1)

    bias2 = jnp.concatenate([gi_bias, gh_bias], axis=0)                      # (2, 6H)
    return wi_all, wh_blk, bias2


# ---------------------------------------------------------------------------
# Full BatchGRU forward (vectorized pad / unpad driven by static a_scope).
# ---------------------------------------------------------------------------
def batch_gru_forward(node, a_scope, bias, gru_params, *,
                      vmem_budget_bytes=40 * 1024 * 1024):
    H = node.shape[1]
    B = len(a_scope)
    T = max(size for _, size in a_scope)

    # molecule tile from VMEM budget: resident/molecule ~ 4*T*(hid 2H + out 4H + gi 6H)
    per_mol = 4 * T * 12 * H
    bt = max(8, min(1024, (vmem_budget_bytes // max(per_mol, 1)) // 8 * 8))
    B_TILE = min(bt, ((B + 7) // 8) * 8)
    B_pad = ((B + B_TILE - 1) // B_TILE) * B_TILE
    vmem_limit = int(min(max(2 * per_mol * B_TILE, 32 * 1024 * 1024),
                         60 * 1024 * 1024))

    # ---- vectorized pad: a single gather instead of O(B) dynamic-update-slices ----
    # TODO(synk): a scalar-prefetch (PrefetchScalarGridSpec) in-kernel row gather would
    # remove this padded-tensor HBM round trip entirely at production scale.
    sizes = np.asarray([s for _, s in a_scope], np.int32)
    starts = np.asarray([s for s, _ in a_scope], np.int32)
    t_grid = np.arange(T, dtype=np.int32)[:, None]
    src = np.zeros((T, B_pad), np.int32)
    src[:, :B] = starts[None, :] + np.minimum(t_grid, sizes[None, :] - 1)
    valid = np.zeros((T, B_pad), bool)
    valid[:, :B] = t_grid < sizes[None, :]
    fill = np.zeros((T, B_pad), np.float32)
    fill[:, :B] = NEG                      # real molecules pad with NEG (relu -> 0)
    hid = jnp.where(jnp.asarray(valid)[:, :, None],
                    node[jnp.asarray(src)],                    # (T, B_pad, H)
                    jnp.asarray(fill)[:, :, None]).astype(jnp.float32)

    rbias = bias.reshape(1, H).astype(jnp.float32)
    wi_all, wh_blk, bias2 = _prep_params(gru_params, H)

    gru_out = _bigru_pallas(hid, rbias, wi_all, wh_blk, bias2,
                            T=T, B_pad=B_pad, B_TILE=B_TILE, H=H,
                            vmem_limit_bytes=vmem_limit)       # (T, B_pad, 2H)

    # ---- vectorized unpad: a single gather instead of O(B) slices + concat --------
    t_idx = np.concatenate([np.arange(s, dtype=np.int32) for _, s in a_scope])
    b_idx = np.concatenate([np.full(s, i, np.int32)
                            for i, (_, s) in enumerate(a_scope)])
    cur_unpad = gru_out[jnp.asarray(t_idx), jnp.asarray(b_idx), :]

    first = jax.nn.relu(node[0:1] + rbias)                     # message[0:1]
    first2 = jnp.concatenate([first, first], axis=1)           # (1, 2H)
    return jnp.concatenate([first2, cur_unpad], axis=0)        # (1 + sum sizes, 2H)


# ---------------------------------------------------------------------------
# Pure-JAX reference (for verification only).
# ---------------------------------------------------------------------------
def batch_gru_reference(node, a_scope, bias, gru_params):
    H = node.shape[1]
    message = jax.nn.relu(node + bias.reshape(1, H))
    max_len = max(size for _, size in a_scope)
    msgs, h0s = [], []
    for start, size in a_scope:
        h0s.append(jnp.max(node[start:start + size], axis=0))
        msgs.append(jnp.pad(message[start:start + size],
                            ((0, max_len - size), (0, 0))))
    X = jnp.stack(msgs)          # (B, T, H)
    H0 = jnp.stack(h0s)          # (B, H)
    wif, whf, bif, bhf, wib, whb, bib, bhb = gru_params

    def make_step(wi, wh, bi, bh):
        def step(h, x_t):
            gi = jnp.dot(x_t, wi) + bi
            gh = jnp.dot(h, wh) + bh
            r = jax.nn.sigmoid(gi[:, :H] + gh[:, :H])
            z = jax.nn.sigmoid(gi[:, H:2 * H] + gh[:, H:2 * H])
            n = jnp.tanh(gi[:, 2 * H:] + r * gh[:, 2 * H:])
            h_new = (1.0 - z) * n + z * h
            return h_new, h_new
        return step

    Xt = jnp.swapaxes(X, 0, 1)   # (T, B, H)
    _, out_f = jax.lax.scan(make_step(wif, whf, bif, bhf), H0, Xt)
    _, out_b_rev = jax.lax.scan(make_step(wib, whb, bib, bhb), H0, Xt[::-1])
    gru_out = jnp.swapaxes(
        jnp.concatenate([out_f, out_b_rev[::-1]], axis=-1), 0, 1)

    chunks = [gru_out[i, :size] for i, (_, size) in enumerate(a_scope)]
    cur_unpad = jnp.concatenate(chunks, axis=0)
    first = jnp.concatenate([message[0:1], message[0:1]], axis=1)
    return jnp.concatenate([first, cur_unpad], axis=0)


if __name__ == "__main__":
    H = 32
    # a_scope of (start, size) per molecule; row 0 of `node` is the dummy atom.
    a_scope = [(1, 3), (4, 5), (9, 4)]
    N = 1 + sum(size for _, size in a_scope)   # 13 total rows

    key = jax.random.PRNGKey(0)
    keys = jax.random.split(key, 10)
    k = 1.0 / math.sqrt(H)
    u = lambda kk, shape: jax.random.uniform(kk, shape, jnp.float32,
                                             minval=-k, maxval=k)

    bias = u(keys[0], (H,))
    # PyTorch nn.GRU params are (3H, H) / (3H,); pass weights transposed so the
    # kernel computes x @ W.  Gate order is (r, z, n) as in PyTorch.
    wif = u(keys[1], (3 * H, H)).T
    whf = u(keys[2], (3 * H, H)).T
    bif = u(keys[3], (3 * H,)).reshape(1, 3 * H)
    bhf = u(keys[4], (3 * H,)).reshape(1, 3 * H)
    wib = u(keys[5], (3 * H, H)).T
    whb = u(keys[6], (3 * H, H)).T
    bib = u(keys[7], (3 * H,)).reshape(1, 3 * H)
    bhb = u(keys[8], (3 * H,)).reshape(1, 3 * H)
    gru_params = (wif, whf, bif, bhf, wib, whb, bib, bhb)

    node = jax.random.normal(keys[9], (N, H), jnp.float32)

    out = batch_gru_forward(node, a_scope, bias, gru_params)
    out = jax.block_until_ready(out)

    ref = batch_gru_reference(node, a_scope, bias, gru_params)
    assert out.shape == (N, 2 * H), out.shape
    err = float(jnp.max(jnp.abs(out - ref)))
    assert err < 5e-2, f"max abs error {err}"
    print("KERNEL_OK")
</pallas_src>

<mosaic_0001>
module attributes {stable_mosaic.version = 11 : i64} {
  func.func @kernel(%arg0: i32, %arg1: memref<5x8x32xf32, #tpu.memory_space<vmem>>, %arg2: memref<1x32xf32, #tpu.memory_space<vmem>>, %arg3: memref<32x192xbf16, #tpu.memory_space<vmem>>, %arg4: memref<64x192xf32, #tpu.memory_space<vmem>>, %arg5: memref<2x192xf32, #tpu.memory_space<vmem>>, %arg6: memref<5x8x64xf32, #tpu.memory_space<vmem>>, %arg7: memref<40x96xf32, #tpu.memory_space<vmem>>, %arg8: memref<40x96xf32, #tpu.memory_space<vmem>>) attributes {dimension_semantics = [#tpu.dimension_semantics<parallel>], iteration_bounds = array<i64: 1>, scalar_prefetch = 0 : i64, scratch_operands = 2 : i64, tpu.core_type = #tpu.core_type<tc>, window_params = [{transform_indices = @transform_0, window_bounds = array<i64: 5, 8, 32>}, {pipeline_mode = #tpu.pipeline_mode<synchronous>, transform_indices = @transform_1, window_bounds = array<i64: 1, 32>}, {pipeline_mode = #tpu.pipeline_mode<synchronous>, transform_indices = @transform_2, window_bounds = array<i64: 32, 192>}, {pipeline_mode = #tpu.pipeline_mode<synchronous>, transform_indices = @transform_3, window_bounds = array<i64: 64, 192>}, {pipeline_mode = #tpu.pipeline_mode<synchronous>, transform_indices = @transform_4, window_bounds = array<i64: 2, 192>}, {transform_indices = @transform_5, window_bounds = array<i64: 5, 8, 64>}]} {
    %c0 = arith.constant 0 : index
    %c0_0 = arith.constant 0 : index
    %c0_1 = arith.constant 0 : index
    %0 = vector.load %arg1[%c0, %c0_0, %c0_1] : memref<5x8x32xf32, #tpu.memory_space<vmem>>, vector<5x8x32xf32>
    %c0_2 = arith.constant 0 : index
    %c0_3 = arith.constant 0 : index
    %1 = vector.load %arg2[%c0_2, %c0_3] : memref<1x32xf32, #tpu.memory_space<vmem>>, vector<1x32xf32>
    %2 = vector.shape_cast %1 : vector<1x32xf32> to vector<1x1x32xf32>
    %3 = vector.broadcast %2 : vector<1x1x32xf32> to vector<5x8x32xf32>
    %4 = arith.addf %0, %3 : vector<5x8x32xf32>
    %cst = arith.constant 0.000000e+00 : f32
    %5 = vector.broadcast %cst : f32 to vector<5x8x32xf32>
    %6 = arith.maximumf %4, %5 : vector<5x8x32xf32>
    %7 = vector.shape_cast %6 : vector<5x8x32xf32> to vector<40x32xf32>
    %8 = arith.truncf %7 : vector<40x32xf32> to vector<40x32xbf16>
    %c0_4 = arith.constant 0 : index
    %c0_5 = arith.constant 0 : index
    %9 = vector.load %arg3[%c0_4, %c0_5] : memref<32x192xbf16, #tpu.memory_space<vmem>>, vector<32x192xbf16>
    %cst_6 = arith.constant dense<0.000000e+00> : vector<40x192xf32>
    %10 = tpu.matmul %8, %9, %cst_6 {dimension_numbers = #tpu.dot_dimension_numbers<[1], [0], [0], [1], [0, 0, 1, 1], [], []>} : vector<40x32xbf16>, vector<32x192xbf16>, vector<40x192xf32> -> vector<40x192xf32>
    %c0_7 = arith.constant 0 : index
    %c0_8 = arith.constant 0 : index
    %11 = vector.load %arg5[%c0_7, %c0_8] : memref<2x192xf32, #tpu.memory_space<vmem>>, vector<1x192xf32>
    %12 = vector.broadcast %11 : vector<1x192xf32> to vector<40x192xf32>
    %13 = arith.addf %10, %12 : vector<40x192xf32>
    %14 = vector.extract_strided_slice %13 {offsets = [0, 0], sizes = [40, 96], strides = [1, 1]} : vector<40x192xf32> to vector<40x96xf32>
    %c0_9 = arith.constant 0 : index
    %c0_10 = arith.constant 0 : index
    %15 = vector.load %arg7[%c0_9, %c0_10] : memref<40x96xf32, #tpu.memory_space<vmem>>, vector<40x96xf32>
    tpu.vector_store %arg7[%c0_9, %c0_10], %14 {strides = array<i32>} : memref<40x96xf32, #tpu.memory_space<vmem>>, vector<40x96xf32>,
    %16 = vector.extract_strided_slice %13 {offsets = [0, 96], sizes = [40, 96], strides = [1, 1]} : vector<40x192xf32> to vector<40x96xf32>
    %c0_11 = arith.constant 0 : index
    %c0_12 = arith.constant 0 : index
    %17 = vector.load %arg8[%c0_11, %c0_12] : memref<40x96xf32, #tpu.memory_space<vmem>>, vector<40x96xf32>
    tpu.vector_store %arg8[%c0_11, %c0_12], %16 {strides = array<i32>} : memref<40x96xf32, #tpu.memory_space<vmem>>, vector<40x96xf32>,
    %cst_13 = arith.constant -1.000000e+30 : f32
    %18 = vector.broadcast %cst_13 : f32 to vector<8x32xf32>
    %c0_i32 = arith.constant 0 : i32
    %19 = arith.index_cast %c0_i32 : i32 to index
    %c0_14 = arith.constant 0 : index
    %c0_15 = arith.constant 0 : index
    %20 = vector.load %arg1[%19, %c0_14, %c0_15] : memref<5x8x32xf32, #tpu.memory_space<vmem>>, vector<1x8x32xf32>
    %21 = vector.shape_cast %20 : vector<1x8x32xf32> to vector<8x32xf32>
    %22 = arith.maximumf %18, %21 : vector<8x32xf32>
    %c1_i32 = arith.constant 1 : i32
    %23 = arith.index_cast %c1_i32 : i32 to index
    %c0_16 = arith.constant 0 : index
    %c0_17 = arith.constant 0 : index
    %24 = vector.load %arg1[%23, %c0_16, %c0_17] : memref<5x8x32xf32, #tpu.memory_space<vmem>>, vector<1x8x32xf32>
    %25 = vector.shape_cast %24 : vector<1x8x32xf32> to vector<8x32xf32>
    %26 = arith.maximumf %22, %25 : vector<8x32xf32>
    %c2_i32 = arith.constant 2 : i32
    %27 = arith.index_cast %c2_i32 : i32 to index
    %c0_18 = arith.constant 0 : index
    %c0_19 = arith.constant 0 : index
    %28 = vector.load %arg1[%27, %c0_18, %c0_19] : memref<5x8x32xf32, #tpu.memory_space<vmem>>, vector<1x8x32xf32>
    %29 = vector.shape_cast %28 : vector<1x8x32xf32> to vector<8x32xf32>
    %30 = arith.maximumf %26, %29 : vector<8x32xf32>
    %c3_i32 = arith.constant 3 : i32
    %31 = arith.index_cast %c3_i32 : i32 to index
    %c0_20 = arith.constant 0 : index
    %c0_21 = arith.constant 0 : index
    %32 = vector.load %arg1[%31, %c0_20, %c0_21] : memref<5x8x32xf32, #tpu.memory_space<vmem>>, vector<1x8x32xf32>
    %33 = vector.shape_cast %32 : vector<1x8x32xf32> to vector<8x32xf32>
    %34 = arith.maximumf %30, %33 : vector<8x32xf32>
    %c4_i32 = arith.constant 4 : i32
    %35 = arith.index_cast %c4_i32 : i32 to index
    %c0_22 = arith.constant 0 : index
    %c0_23 = arith.constant 0 : index
    %36 = vector.load %arg1[%35, %c0_22, %c0_23] : memref<5x8x32xf32, #tpu.memory_space<vmem>>, vector<1x8x32xf32>
    %37 = vector.shape_cast %36 : vector<1x8x32xf32> to vector<8x32xf32>
    %38 = arith.maximumf %34, %37 : vector<8x32xf32>
    %c5_i32 = arith.constant 5 : i32
    %c0_24 = arith.constant 0 : index
    %c0_25 = arith.constant 0 : index
    %39 = vector.load %arg4[%c0_24, %c0_25] : memref<64x192xf32, #tpu.memory_space<vmem>>, vector<64x192xf32>
    %c1 = arith.constant 1 : index
    %c0_26 = arith.constant 0 : index
    %40 = vector.load %arg5[%c1, %c0_26] : memref<2x192xf32, #tpu.memory_space<vmem>>, vector<1x192xf32>
    %c0_i32_27 = arith.constant 0 : i32
    %c4_i32_28 = arith.constant 4 : i32
    %41 = arith.subi %c4_i32_28, %c0_i32_27 : i32
    %42 = tpu.concatenate %38, %38 in 1 : vector<8x32xf32>, vector<8x32xf32> -> vector<8x64xf32>
    %cst_29 = arith.constant dense<0.000000e+00> : vector<8x192xf32>
    %43 = tpu.matmul %42, %39, %cst_29 {dimension_numbers = #tpu.dot_dimension_numbers<[1], [0], [0], [1], [0, 0, 1, 1], [], []>} : vector<8x64xf32>, vector<64x192xf32>, vector<8x192xf32> -> vector<8x192xf32>
    %44 = vector.broadcast %40 : vector<1x192xf32> to vector<8x192xf32>
    %45 = arith.addf %43, %44 : vector<8x192xf32>
    %c8_i32 = arith.constant 8 : i32
    %46 = arith.muli %c0_i32_27, %c8_i32 : i32
    %47 = tpu.assume_multiple %46, 8 : i32
    %c8_i32_30 = arith.constant 8 : i32
    %48 = arith.muli %41, %c8_i32_30 : i32
    %49 = tpu.assume_multiple %48, 8 : i32
    %50 = arith.index_cast %47 : i32 to index
    %c0_31 = arith.constant 0 : index
    %51 = vector.load %arg7[%50, %c0_31] : memref<40x96xf32, #tpu.memory_space<vmem>>, vector<8x96xf32>
    %52 = arith.index_cast %49 : i32 to index
    %c0_32 = arith.constant 0 : index
    %53 = vector.load %arg8[%52, %c0_32] : memref<40x96xf32, #tpu.memory_space<vmem>>, vector<8x96xf32>
    %54 = vector.extract_strided_slice %51 {offsets = [0, 0], sizes = [8, 32], strides = [1, 1]} : vector<8x96xf32> to vector<8x32xf32>
    %55 = vector.extract_strided_slice %45 {offsets = [0, 0], sizes = [8, 32], strides = [1, 1]} : vector<8x192xf32> to vector<8x32xf32>
    %56 = arith.addf %54, %55 : vector<8x32xf32>
    %57 = arith.negf %56 : vector<8x32xf32>
    %58 = math.exp %57 : vector<8x32xf32>
    %cst_33 = arith.constant 1.000000e+00 : f32
    %59 = vector.broadcast %cst_33 : f32 to vector<8x32xf32>
    %60 = arith.addf %59, %58 : vector<8x32xf32>
    %61 = arith.divf %59, %60 : vector<8x32xf32>
    %62 = vector.extract_strided_slice %51 {offsets = [0, 32], sizes = [8, 32], strides = [1, 1]} : vector<8x96xf32> to vector<8x32xf32>
    %63 = vector.extract_strided_slice %45 {offsets = [0, 32], sizes = [8, 32], strides = [1, 1]} : vector<8x192xf32> to vector<8x32xf32>
    %64 = arith.addf %62, %63 : vector<8x32xf32>
    %65 = arith.negf %64 : vector<8x32xf32>
    %66 = math.exp %65 : vector<8x32xf32>
    %cst_34 = arith.constant 1.000000e+00 : f32
    %67 = vector.broadcast %cst_34 : f32 to vector<8x32xf32>
    %68 = arith.addf %67, %66 : vector<8x32xf32>
    %69 = arith.divf %67, %68 : vector<8x32xf32>
    %70 = vector.extract_strided_slice %51 {offsets = [0, 64], sizes = [8, 32], strides = [1, 1]} : vector<8x96xf32> to vector<8x32xf32>
    %71 = vector.extract_strided_slice %45 {offsets = [0, 64], sizes = [8, 32], strides = [1, 1]} : vector<8x192xf32> to vector<8x32xf32>
    %72 = arith.mulf %61, %71 : vector<8x32xf32>
    %73 = arith.addf %70, %72 : vector<8x32xf32>
    %74 = math.tanh %73 : vector<8x32xf32>
    %cst_35 = arith.constant 1.000000e+00 : f32
    %75 = vector.broadcast %cst_35 : f32 to vector<8x32xf32>
    %76 = arith.subf %75, %69 : vector<8x32xf32>
    %77 = arith.mulf %76, %74 : vector<8x32xf32>
    %78 = arith.mulf %69, %38 : vector<8x32xf32>
    %79 = arith.addf %77, %78 : vector<8x32xf32>
    %80 = vector.extract_strided_slice %53 {offsets = [0, 0], sizes = [8, 32], strides = [1, 1]} : vector<8x96xf32> to vector<8x32xf32>
    %81 = vector.extract_strided_slice %45 {offsets = [0, 96], sizes = [8, 32], strides = [1, 1]} : vector<8x192xf32> to vector<8x32xf32>
    %82 = arith.addf %80, %81 : vector<8x32xf32>
    %83 = arith.negf %82 : vector<8x32xf32>
    %84 = math.exp %83 : vector<8x32xf32>
    %cst_36 = arith.constant 1.000000e+00 : f32
    %85 = vector.broadcast %cst_36 : f32 to vector<8x32xf32>
    %86 = arith.addf %85, %84 : vector<8x32xf32>
    %87 = arith.divf %85, %86 : vector<8x32xf32>
    %88 = vector.extract_strided_slice %53 {offsets = [0, 32], sizes = [8, 32], strides = [1, 1]} : vector<8x96xf32> to vector<8x32xf32>
    %89 = vector.extract_strided_slice %45 {offsets = [0, 128], sizes = [8, 32], strides = [1, 1]} : vector<8x192xf32> to vector<8x32xf32>
    %90 = arith.addf %88, %89 : vector<8x32xf32>
    %91 = arith.negf %90 : vector<8x32xf32>
    %92 = math.exp %91 : vector<8x32xf32>
    %cst_37 = arith.constant 1.000000e+00 : f32
    %93 = vector.broadcast %cst_37 : f32 to vector<8x32xf32>
    %94 = arith.addf %93, %92 : vector<8x32xf32>
    %95 = arith.divf %93, %94 : vector<8x32xf32>
    %96 = vector.extract_strided_slice %53 {offsets = [0, 64], sizes = [8, 32], strides = [1, 1]} : vector<8x96xf32> to vector<8x32xf32>
    %97 = vector.extract_strided_slice %45 {offsets = [0, 160], sizes = [8, 32], strides = [1, 1]} : vector<8x192xf32> to vector<8x32xf32>
    %98 = arith.mulf %87, %97 : vector<8x32xf32>
    %99 = arith.addf %96, %98 : vector<8x32xf32>
    %100 = math.tanh %99 : vector<8x32xf32>
    %cst_38 = arith.constant 1.000000e+00 : f32
    %101 = vector.broadcast %cst_38 : f32 to vector<8x32xf32>
    %102 = arith.subf %101, %95 : vector<8x32xf32>
    %103 = arith.mulf %102, %100 : vector<8x32xf32>
    %104 = arith.mulf %95, %38 : vector<8x32xf32>
    %105 = arith.addf %103, %104 : vector<8x32xf32>
    %106 = arith.index_cast %c0_i32_27 : i32 to index
    %c0_39 = arith.constant 0 : index
    %c0_40 = arith.constant 0 : index
    %107 = vector.load %arg6[%106, %c0_39, %c0_40] : memref<5x8x64xf32, #tpu.memory_space<vmem>>, vector<1x8x32xf32>
    %108 = vector.shape_cast %107 : vector<1x8x32xf32> to vector<8x32xf32>
    %109 = vector.shape_cast %79 : vector<8x32xf32> to vector<1x8x32xf32>
    tpu.vector_store %arg6[%106, %c0_39, %c0_40], %109 {strides = array<i32>} : memref<5x8x64xf32, #tpu.memory_space<vmem>>, vector<1x8x32xf32>,
    %110 = arith.index_cast %41 : i32 to index
    %c0_41 = arith.constant 0 : index
    %c32 = arith.constant 32 : index
    %111 = vector.load %arg6[%110, %c0_41, %c32] : memref<5x8x64xf32, #tpu.memory_space<vmem>>, vector<1x8x32xf32>
    %112 = vector.shape_cast %111 : vector<1x8x32xf32> to vector<8x32xf32>
    %113 = vector.shape_cast %105 : vector<8x32xf32> to vector<1x8x32xf32>
    tpu.vector_store %arg6[%110, %c0_41, %c32], %113 {strides = array<i32>} : memref<5x8x64xf32, #tpu.memory_space<vmem>>, vector<1x8x32xf32>,
    %c1_i32_42 = arith.constant 1 : i32
    %c4_i32_43 = arith.constant 4 : i32
    %114 = arith.subi %c4_i32_43, %c1_i32_42 : i32
    %115 = tpu.concatenate %79, %105 in 1 : vector<8x32xf32>, vector<8x32xf32> -> vector<8x64xf32>
    %cst_44 = arith.constant dense<0.000000e+00> : vector<8x192xf32>
    %116 = tpu.matmul %115, %39, %cst_44 {dimension_numbers = #tpu.dot_dimension_numbers<[1], [0], [0], [1], [0, 0, 1, 1], [], []>} : vector<8x64xf32>, vector<64x192xf32>, vector<8x192xf32> -> vector<8x192xf32>
    %117 = vector.broadcast %40 : vector<1x192xf32> to vector<8x192xf32>
    %118 = arith.addf %116, %117 : vector<8x192xf32>
    %c8_i32_45 = arith.constant 8 : i32
    %119 = arith.muli %c1_i32_42, %c8_i32_45 : i32
    %120 = tpu.assume_multiple %119, 8 : i32
    %c8_i32_46 = arith.constant 8 : i32
    %121 = arith.muli %114, %c8_i32_46 : i32
    %122 = tpu.assume_multiple %121, 8 : i32
    %123 = arith.index_cast %120 : i32 to index
    %c0_47 = arith.constant 0 : index
    %124 = vector.load %arg7[%123, %c0_47] : memref<40x96xf32, #tpu.memory_space<vmem>>, vector<8x96xf32>
    %125 = arith.index_cast %122 : i32 to index
    %c0_48 = arith.constant 0 : index
    %126 = vector.load %arg8[%125, %c0_48] : memref<40x96xf32, #tpu.memory_space<vmem>>, vector<8x96xf32>
    %127 = vector.extract_strided_slice %124 {offsets = [0, 0], sizes = [8, 32], strides = [1, 1]} : vector<8x96xf32> to vector<8x32xf32>
    %128 = vector.extract_strided_slice %118 {offsets = [0, 0], sizes = [8, 32], strides = [1, 1]} : vector<8x192xf32> to vector<8x32xf32>
    %129 = arith.addf %127, %128 : vector<8x32xf32>
    %130 = arith.negf %129 : vector<8x32xf32>
    %131 = math.exp %130 : vector<8x32xf32>
    %cst_49 = arith.constant 1.000000e+00 : f32
    %132 = vector.broadcast %cst_49 : f32 to vector<8x32xf32>
    %133 = arith.addf %132, %131 : vector<8x32xf32>
    %134 = arith.divf %132, %133 : vector<8x32xf32>
    %135 = vector.extract_strided_slice %124 {offsets = [0, 32], sizes = [8, 32], strides = [1, 1]} : vector<8x96xf32> to vector<8x32xf32>
    %136 = vector.extract_strided_slice %118 {offsets = [0, 32], sizes = [8, 32], strides = [1, 1]} : vector<8x192xf32> to vector<8x32xf32>
    %137 = arith.addf %135, %136 : vector<8x32xf32>
    %138 = arith.negf %137 : vector<8x32xf32>
    %139 = math.exp %138 : vector<8x32xf32>
    %cst_50 = arith.constant 1.000000e+00 : f32
    %140 = vector.broadcast %cst_50 : f32 to vector<8x32xf32>
    %141 = arith.addf %140, %139 : vector<8x32xf32>
    %142 = arith.divf %140, %141 : vector<8x32xf32>
    %143 = vector.extract_strided_slice %124 {offsets = [0, 64], sizes = [8, 32], strides = [1, 1]} : vector<8x96xf32> to vector<8x32xf32>
    %144 = vector.extract_strided_slice %118 {offsets = [0, 64], sizes = [8, 32], strides = [1, 1]} : vector<8x192xf32> to vector<8x32xf32>
    %145 = arith.mulf %134, %144 : vector<8x32xf32>
    %146 = arith.addf %143, %145 : vector<8x32xf32>
    %147 = math.tanh %146 : vector<8x32xf32>
    %cst_51 = arith.constant 1.000000e+00 : f32
    %148 = vector.broadcast %cst_51 : f32 to vector<8x32xf32>
    %149 = arith.subf %148, %142 : vector<8x32xf32>
    %150 = arith.mulf %149, %147 : vector<8x32xf32>
    %151 = arith.mulf %142, %79 : vector<8x32xf32>
    %152 = arith.addf %150, %151 : vector<8x32xf32>
    %153 = vector.extract_strided_slice %126 {offsets = [0, 0], sizes = [8, 32], strides = [1, 1]} : vector<8x96xf32> to vector<8x32xf32>
    %154 = vector.extract_strided_slice %118 {offsets = [0, 96], sizes = [8, 32], strides = [1, 1]} : vector<8x192xf32> to vector<8x32xf32>
    %155 = arith.addf %153, %154 : vector<8x32xf32>
    %156 = arith.negf %155 : vector<8x32xf32>
    %157 = math.exp %156 : vector<8x32xf32>
    %cst_52 = arith.constant 1.000000e+00 : f32
    %158 = vector.broadcast %cst_52 : f32 to vector<8x32xf32>
    %159 = arith.addf %158, %157 : vector<8x32xf32>
    %160 = arith.divf %158, %159 : vector<8x32xf32>
    %161 = vector.extract_strided_slice %126 {offsets = [0, 32], sizes = [8, 32], strides = [1, 1]} : vector<8x96xf32> to vector<8x32xf32>
    %162 = vector.extract_strided_slice %118 {offsets = [0, 128], sizes = [8, 32], strides = [1, 1]} : vector<8x192xf32> to vector<8x32xf32>
    %163 = arith.addf %161, %162 : vector<8x32xf32>
    %164 = arith.negf %163 : vector<8x32xf32>
    %165 = math.exp %164 : vector<8x32xf32>
    %cst_53 = arith.constant 1.000000e+00 : f32
    %166 = vector.broadcast %cst_53 : f32 to vector<8x32xf32>
    %167 = arith.addf %166, %165 : vector<8x32xf32>
    %168 = arith.divf %166, %167 : vector<8x32xf32>
    %169 = vector.extract_strided_slice %126 {offsets = [0, 64], sizes = [8, 32], strides = [1, 1]} : vector<8x96xf32> to vector<8x32xf32>
    %170 = vector.extract_strided_slice %118 {offsets = [0, 160], sizes = [8, 32], strides = [1, 1]} : vector<8x192xf32> to vector<8x32xf32>
    %171 = arith.mulf %160, %170 : vector<8x32xf32>
    %172 = arith.addf %169, %171 : vector<8x32xf32>
    %173 = math.tanh %172 : vector<8x32xf32>
    %cst_54 = arith.constant 1.000000e+00 : f32
    %174 = vector.broadcast %cst_54 : f32 to vector<8x32xf32>
    %175 = arith.subf %174, %168 : vector<8x32xf32>
    %176 = arith.mulf %175, %173 : vector<8x32xf32>
    %177 = arith.mulf %168, %105 : vector<8x32xf32>
    %178 = arith.addf %176, %177 : vector<8x32xf32>
    %179 = arith.index_cast %c1_i32_42 : i32 to index
    %c0_55 = arith.constant 0 : index
    %c0_56 = arith.constant 0 : index
    %180 = vector.load %arg6[%179, %c0_55, %c0_56] : memref<5x8x64xf32, #tpu.memory_space<vmem>>, vector<1x8x32xf32>
    %181 = vector.shape_cast %180 : vector<1x8x32xf32> to vector<8x32xf32>
    %182 = vector.shape_cast %152 : vector<8x32xf32> to vector<1x8x32xf32>
    tpu.vector_store %arg6[%179, %c0_55, %c0_56], %182 {strides = array<i32>} : memref<5x8x64xf32, #tpu.memory_space<vmem>>, vector<1x8x32xf32>,
    %183 = arith.index_cast %114 : i32 to index
    %c0_57 = arith.constant 0 : index
    %c32_58 = arith.constant 32 : index
    %184 = vector.load %arg6[%183, %c0_57, %c32_58] : memref<5x8x64xf32, #tpu.memory_space<vmem>>, vector<1x8x32xf32>
    %185 = vector.shape_cast %184 : vector<1x8x32xf32> to vector<8x32xf32>
    %186 = vector.shape_cast %178 : vector<8x32xf32> to vector<1x8x32xf32>
    tpu.vector_store %arg6[%183, %c0_57, %c32_58], %186 {strides = array<i32>} : memref<5x8x64xf32, #tpu.memory_space<vmem>>, vector<1x8x32xf32>,
    %c2_i32_59 = arith.constant 2 : i32
    %c4_i32_60 = arith.constant 4 : i32
    %187 = arith.subi %c4_i32_60, %c2_i32_59 : i32
    %188 = tpu.concatenate %152, %178 in 1 : vector<8x32xf32>, vector<8x32xf32> -> vector<8x64xf32>
    %cst_61 = arith.constant dense<0.000000e+00> : vector<8x192xf32>
    %189 = tpu.matmul %188, %39, %cst_61 {dimension_numbers = #tpu.dot_dimension_numbers<[1], [0], [0], [1], [0, 0, 1, 1], [], []>} : vector<8x64xf32>, vector<64x192xf32>, vector<8x192xf32> -> vector<8x192xf32>
    %190 = vector.broadcast %40 : vector<1x192xf32> to vector<8x192xf32>
    %191 = arith.addf %189, %190 : vector<8x192xf32>
    %c8_i32_62 = arith.constant 8 : i32
    %192 = arith.muli %c2_i32_59, %c8_i32_62 : i32
    %193 = tpu.assume_multiple %192, 8 : i32
    %c8_i32_63 = arith.constant 8 : i32
    %194 = arith.muli %187, %c8_i32_63 : i32
    %195 = tpu.assume_multiple %194, 8 : i32
    %196 = arith.index_cast %193 : i32 to index
    %c0_64 = arith.constant 0 : index
    %197 = vector.load %arg7[%196, %c0_64] : memref<40x96xf32, #tpu.memory_space<vmem>>, vector<8x96xf32>
    %198 = arith.index_cast %195 : i32 to index
    %c0_65 = arith.constant 0 : index
    %199 = vector.load %arg8[%198, %c0_65] : memref<40x96xf32, #tpu.memory_space<vmem>>, vector<8x96xf32>
    %200 = vector.extract_strided_slice %197 {offsets = [0, 0], sizes = [8, 32], strides = [1, 1]} : vector<8x96xf32> to vector<8x32xf32>
    %201 = vector.extract_strided_slice %191 {offsets = [0, 0], sizes = [8, 32], strides = [1, 1]} : vector<8x192xf32> to vector<8x32xf32>
    %202 = arith.addf %200, %201 : vector<8x32xf32>
    %203 = arith.negf %202 : vector<8x32xf32>
    %204 = math.exp %203 : vector<8x32xf32>
    %cst_66 = arith.constant 1.000000e+00 : f32
    %205 = vector.broadcast %cst_66 : f32 to vector<8x32xf32>
    %206 = arith.addf %205, %204 : vector<8x32xf32>
    %207 = arith.divf %205, %206 : vector<8x32xf32>
    %208 = vector.extract_strided_slice %197 {offsets = [0, 32], sizes = [8, 32], strides = [1, 1]} : vector<8x96xf32> to vector<8x32xf32>
    %209 = vector.extract_strided_slice %191 {offsets = [0, 32], sizes = [8, 32], strides = [1, 1]} : vector<8x192xf32> to vector<8x32xf32>
    %210 = arith.addf %208, %209 : vector<8x32xf32>
    %211 = arith.negf %210 : vector<8x32xf32>
    %212 = math.exp %211 : vector<8x32xf32>
    %cst_67 = arith.constant 1.000000e+00 : f32
    %213 = vector.broadcast %cst_67 : f32 to vector<8x32xf32>
    %214 = arith.addf %213, %212 : vector<8x32xf32>
    %215 = arith.divf %213, %214 : vector<8x32xf32>
    %216 = vector.extract_strided_slice %197 {offsets = [0, 64], sizes = [8, 32], strides = [1, 1]} : vector<8x96xf32> to vector<8x32xf32>
    %217 = vector.extract_strided_slice %191 {offsets = [0, 64], sizes = [8, 32], strides = [1, 1]} : vector<8x192xf32> to vector<8x32xf32>
    %218 = arith.mulf %207, %217 : vector<8x32xf32>
    %219 = arith.addf %216, %218 : vector<8x32xf32>
    %220 = math.tanh %219 : vector<8x32xf32>
    %cst_68 = arith.constant 1.000000e+00 : f32
    %221 = vector.broadcast %cst_68 : f32 to vector<8x32xf32>
    %222 = arith.subf %221, %215 : vector<8x32xf32>
    %223 = arith.mulf %222, %220 : vector<8x32xf32>
    %224 = arith.mulf %215, %152 : vector<8x32xf32>
    %225 = arith.addf %223, %224 : vector<8x32xf32>
    %226 = vector.extract_strided_slice %199 {offsets = [0, 0], sizes = [8, 32], strides = [1, 1]} : vector<8x96xf32> to vector<8x32xf32>
    %227 = vector.extract_strided_slice %191 {offsets = [0, 96], sizes = [8, 32], strides = [1, 1]} : vector<8x192xf32> to vector<8x32xf32>
    %228 = arith.addf %226, %227 : vector<8x32xf32>
    %229 = arith.negf %228 : vector<8x32xf32>
    %230 = math.exp %229 : vector<8x32xf32>
    %cst_69 = arith.constant 1.000000e+00 : f32
    %231 = vector.broadcast %cst_69 : f32 to vector<8x32xf32>
    %232 = arith.addf %231, %230 : vector<8x32xf32>
    %233 = arith.divf %231, %232 : vector<8x32xf32>
    %234 = vector.extract_strided_slice %199 {offsets = [0, 32], sizes = [8, 32], strides = [1, 1]} : vector<8x96xf32> to vector<8x32xf32>
    %235 = vector.extract_strided_slice %191 {offsets = [0, 128], sizes = [8, 32], strides = [1, 1]} : vector<8x192xf32> to vector<8x32xf32>
    %236 = arith.addf %234, %235 : vector<8x32xf32>
    %237 = arith.negf %236 : vector<8x32xf32>
    %238 = math.exp %237 : vector<8x32xf32>
    %cst_70 = arith.constant 1.000000e+00 : f32
    %239 = vector.broadcast %cst_70 : f32 to vector<8x32xf32>
    %240 = arith.addf %239, %238 : vector<8x32xf32>
    %241 = arith.divf %239, %240 : vector<8x32xf32>
    %242 = vector.extract_strided_slice %199 {offsets = [0, 64], sizes = [8, 32], strides = [1, 1]} : vector<8x96xf32> to vector<8x32xf32>
    %243 = vector.extract_strided_slice %191 {offsets = [0, 160], sizes = [8, 32], strides = [1, 1]} : vector<8x192xf32> to vector<8x32xf32>
    %244 = arith.mulf %233, %243 : vector<8x32xf32>
    %245 = arith.addf %242, %244 : vector<8x32xf32>
    %246 = math.tanh %245 : vector<8x32xf32>
    %cst_71 = arith.constant 1.000000e+00 : f32
    %247 = vector.broadcast %cst_71 : f32 to vector<8x32xf32>
    %248 = arith.subf %247, %241 : vector<8x32xf32>
    %249 = arith.mulf %248, %246 : vector<8x32xf32>
    %250 = arith.mulf %241, %178 : vector<8x32xf32>
    %251 = arith.addf %249, %250 : vector<8x32xf32>
    %252 = arith.index_cast %c2_i32_59 : i32 to index
    %c0_72 = arith.constant 0 : index
    %c0_73 = arith.constant 0 : index
    %253 = vector.load %arg6[%252, %c0_72, %c0_73] : memref<5x8x64xf32, #tpu.memory_space<vmem>>, vector<1x8x32xf32>
    %254 = vector.shape_cast %253 : vector<1x8x32xf32> to vector<8x32xf32>
    %255 = vector.shape_cast %225 : vector<8x32xf32> to vector<1x8x32xf32>
    tpu.vector_store %arg6[%252, %c0_72, %c0_73], %255 {strides = array<i32>} : memref<5x8x64xf32, #tpu.memory_space<vmem>>, vector<1x8x32xf32>,
    %256 = arith.index_cast %187 : i32 to index
    %c0_74 = arith.constant 0 : index
    %c32_75 = arith.constant 32 : index
    %257 = vector.load %arg6[%256, %c0_74, %c32_75] : memref<5x8x64xf32, #tpu.memory_space<vmem>>, vector<1x8x32xf32>
    %258 = vector.shape_cast %257 : vector<1x8x32xf32> to vector<8x32xf32>
    %259 = vector.shape_cast %251 : vector<8x32xf32> to vector<1x8x32xf32>
    tpu.vector_store %arg6[%256, %c0_74, %c32_75], %259 {strides = array<i32>} : memref<5x8x64xf32, #tpu.memory_space<vmem>>, vector<1x8x32xf32>,
    %c3_i32_76 = arith.constant 3 : i32
    %c4_i32_77 = arith.constant 4 : i32
    %260 = arith.subi %c4_i32_77, %c3_i32_76 : i32
    %261 = tpu.concatenate %225, %251 in 1 : vector<8x32xf32>, vector<8x32xf32> -> vector<8x64xf32>
    %cst_78 = arith.constant dense<0.000000e+00> : vector<8x192xf32>
    %262 = tpu.matmul %261, %39, %cst_78 {dimension_numbers = #tpu.dot_dimension_numbers<[1], [0], [0], [1], [0, 0, 1, 1], [], []>} : vector<8x64xf32>, vector<64x192xf32>, vector<8x192xf32> -> vector<8x192xf32>
    %263 = vector.broadcast %40 : vector<1x192xf32> to vector<8x192xf32>
    %264 = arith.addf %262, %263 : vector<8x192xf32>
    %c8_i32_79 = arith.constant 8 : i32
    %265 = arith.muli %c3_i32_76, %c8_i32_79 : i32
    %266 = tpu.assume_multiple %265, 8 : i32
    %c8_i32_80 = arith.constant 8 : i32
    %267 = arith.muli %260, %c8_i32_80 : i32
    %268 = tpu.assume_multiple %267, 8 : i32
    %269 = arith.index_cast %266 : i32 to index
    %c0_81 = arith.constant 0 : index
    %270 = vector.load %arg7[%269, %c0_81] : memref<40x96xf32, #tpu.memory_space<vmem>>, vector<8x96xf32>
    %271 = arith.index_cast %268 : i32 to index
    %c0_82 = arith.constant 0 : index
    %272 = vector.load %arg8[%271, %c0_82] : memref<40x96xf32, #tpu.memory_space<vmem>>, vector<8x96xf32>
    %273 = vector.extract_strided_slice %270 {offsets = [0, 0], sizes = [8, 32], strides = [1, 1]} : vector<8x96xf32> to vector<8x32xf32>
    %274 = vector.extract_strided_slice %264 {offsets = [0, 0], sizes = [8, 32], strides = [1, 1]} : vector<8x192xf32> to vector<8x32xf32>
    %275 = arith.addf %273, %274 : vector<8x32xf32>
    %276 = arith.negf %275 : vector<8x32xf32>
    %277 = math.exp %276 : vector<8x32xf32>
    %cst_83 = arith.constant 1.000000e+00 : f32
    %278 = vector.broadcast %cst_83 : f32 to vector<8x32xf32>
    %279 = arith.addf %278, %277 : vector<8x32xf32>
    %280 = arith.divf %278, %279 : vector<8x32xf32>
    %281 = vector.extract_strided_slice %270 {offsets = [0, 32], sizes = [8, 32], strides = [1, 1]} : vector<8x96xf32> to vector<8x32xf32>
    %282 = vector.extract_strided_slice %264 {offsets = [0, 32], sizes = [8, 32], strides = [1, 1]} : vector<8x192xf32> to vector<8x32xf32>
    %283 = arith.addf %281, %282 : vector<8x32xf32>
    %284 = arith.negf %283 : vector<8x32xf32>
    %285 = math.exp %284 : vector<8x32xf32>
    %cst_84 = arith.constant 1.000000e+00 : f32
    %286 = vector.broadcast %cst_84 : f32 to vector<8x32xf32>
    %287 = arith.addf %286, %285 : vector<8x32xf32>
    %288 = arith.divf %286, %287 : vector<8x32xf32>
    %289 = vector.extract_strided_slice %270 {offsets = [0, 64], sizes = [8, 32], strides = [1, 1]} : vector<8x96xf32> to vector<8x32xf32>
    %290 = vector.extract_strided_slice %264 {offsets = [0, 64], sizes = [8, 32], strides = [1, 1]} : vector<8x192xf32> to vector<8x32xf32>
    %291 = arith.mulf %280, %290 : vector<8x32xf32>
    %292 = arith.addf %289, %291 : vector<8x32xf32>
    %293 = math.tanh %292 : vector<8x32xf32>
    %cst_85 = arith.constant 1.000000e+00 : f32
    %294 = vector.broadcast %cst_85 : f32 to vector<8x32xf32>
    %295 = arith.subf %294, %288 : vector<8x32xf32>
    %296 = arith.mulf %295, %293 : vector<8x32xf32>
    %297 = arith.mulf %288, %225 : vector<8x32xf32>
    %298 = arith.addf %296, %297 : vector<8x32xf32>
    %299 = vector.extract_strided_slice %272 {offsets = [0, 0], sizes = [8, 32], strides = [1, 1]} : vector<8x96xf32> to vector<8x32xf32>
    %300 = vector.extract_strided_slice %264 {offsets = [0, 96], sizes = [8, 32], strides = [1, 1]} : vector<8x192xf32> to vector<8x32xf32>
    %301 = arith.addf %299, %300 : vector<8x32xf32>
    %302 = arith.negf %301 : vector<8x32xf32>
    %303 = math.exp %302 : vector<8x32xf32>
    %cst_86 = arith.constant 1.000000e+00 : f32
    %304 = vector.broadcast %cst_86 : f32 to vector<8x32xf32>
    %305 = arith.addf %304, %303 : vector<8x32xf32>
    %306 = arith.divf %304, %305 : vector<8x32xf32>
    %307 = vector.extract_strided_slice %272 {offsets = [0, 32], sizes = [8, 32], strides = [1, 1]} : vector<8x96xf32> to vector<8x32xf32>
    %308 = vector.extract_strided_slice %264 {offsets = [0, 128], sizes = [8, 32], strides = [1, 1]} : vector<8x192xf32> to vector<8x32xf32>
    %309 = arith.addf %307, %308 : vector<8x32xf32>
    %310 = arith.negf %309 : vector<8x32xf32>
    %311 = math.exp %310 : vector<8x32xf32>
    %cst_87 = arith.constant 1.000000e+00 : f32
    %312 = vector.broadcast %cst_87 : f32 to vector<8x32xf32>
    %313 = arith.addf %312, %311 : vector<8x32xf32>
    %314 = arith.divf %312, %313 : vector<8x32xf32>
    %315 = vector.extract_strided_slice %272 {offsets = [0, 64], sizes = [8, 32], strides = [1, 1]} : vector<8x96xf32> to vector<8x32xf32>
    %316 = vector.extract_strided_slice %264 {offsets = [0, 160], sizes = [8, 32], strides = [1, 1]} : vector<8x192xf32> to vector<8x32xf32>
    %317 = arith.mulf %306, %316 : vector<8x32xf32>
    %318 = arith.addf %315, %317 : vector<8x32xf32>
    %319 = math.tanh %318 : vector<8x32xf32>
    %cst_88 = arith.constant 1.000000e+00 : f32
    %320 = vector.broadcast %cst_88 : f32 to vector<8x32xf32>
    %321 = arith.subf %320, %314 : vector<8x32xf32>
    %322 = arith.mulf %321, %319 : vector<8x32xf32>
    %323 = arith.mulf %314, %251 : vector<8x32xf32>
    %324 = arith.addf %322, %323 : vector<8x32xf32>
    %325 = arith.index_cast %c3_i32_76 : i32 to index
    %c0_89 = arith.constant 0 : index
    %c0_90 = arith.constant 0 : index
    %326 = vector.load %arg6[%325, %c0_89, %c0_90] : memref<5x8x64xf32, #tpu.memory_space<vmem>>, vector<1x8x32xf32>
    %327 = vector.shape_cast %326 : vector<1x8x32xf32> to vector<8x32xf32>
    %328 = vector.shape_cast %298 : vector<8x32xf32> to vector<1x8x32xf32>
    tpu.vector_store %arg6[%325, %c0_89, %c0_90], %328 {strides = array<i32>} : memref<5x8x64xf32, #tpu.memory_space<vmem>>, vector<1x8x32xf32>,
    %329 = arith.index_cast %260 : i32 to index
    %c0_91 = arith.constant 0 : index
    %c32_92 = arith.constant 32 : index
    %330 = vector.load %arg6[%329, %c0_91, %c32_92] : memref<5x8x64xf32, #tpu.memory_space<vmem>>, vector<1x8x32xf32>
    %331 = vector.shape_cast %330 : vector<1x8x32xf32> to vector<8x32xf32>
    %332 = vector.shape_cast %324 : vector<8x32xf32> to vector<1x8x32xf32>
    tpu.vector_store %arg6[%329, %c0_91, %c32_92], %332 {strides = array<i32>} : memref<5x8x64xf32, #tpu.memory_space<vmem>>, vector<1x8x32xf32>,
    %c4_i32_93 = arith.constant 4 : i32
    %c4_i32_94 = arith.constant 4 : i32
    %333 = arith.subi %c4_i32_94, %c4_i32_93 : i32
    %334 = tpu.concatenate %298, %324 in 1 : vector<8x32xf32>, vector<8x32xf32> -> vector<8x64xf32>
    %cst_95 = arith.constant dense<0.000000e+00> : vector<8x192xf32>
    %335 = tpu.matmul %334, %39, %cst_95 {dimension_numbers = #tpu.dot_dimension_numbers<[1], [0], [0], [1], [0, 0, 1, 1], [], []>} : vector<8x64xf32>, vector<64x192xf32>, vector<8x192xf32> -> vector<8x192xf32>
    %336 = vector.broadcast %40 : vector<1x192xf32> to vector<8x192xf32>
    %337 = arith.addf %335, %336 : vector<8x192xf32>
    %c8_i32_96 = arith.constant 8 : i32
    %338 = arith.muli %c4_i32_93, %c8_i32_96 : i32
    %339 = tpu.assume_multiple %338, 8 : i32
    %c8_i32_97 = arith.constant 8 : i32
    %340 = arith.muli %333, %c8_i32_97 : i32
    %341 = tpu.assume_multiple %340, 8 : i32
    %342 = arith.index_cast %339 : i32 to index
    %c0_98 = arith.constant 0 : index
    %343 = vector.load %arg7[%342, %c0_98] : memref<40x96xf32, #tpu.memory_space<vmem>>, vector<8x96xf32>
    %344 = arith.index_cast %341 : i32 to index
    %c0_99 = arith.constant 0 : index
    %345 = vector.load %arg8[%344, %c0_99] : memref<40x96xf32, #tpu.memory_space<vmem>>, vector<8x96xf32>
    %346 = vector.extract_strided_slice %343 {offsets = [0, 0], sizes = [8, 32], strides = [1, 1]} : vector<8x96xf32> to vector<8x32xf32>
    %347 = vector.extract_strided_slice %337 {offsets = [0, 0], sizes = [8, 32], strides = [1, 1]} : vector<8x192xf32> to vector<8x32xf32>
    %348 = arith.addf %346, %347 : vector<8x32xf32>
    %349 = arith.negf %348 : vector<8x32xf32>
    %350 = math.exp %349 : vector<8x32xf32>
    %cst_100 = arith.constant 1.000000e+00 : f32
    %351 = vector.broadcast %cst_100 : f32 to vector<8x32xf32>
    %352 = arith.addf %351, %350 : vector<8x32xf32>
    %353 = arith.divf %351, %352 : vector<8x32xf32>
    %354 = vector.extract_strided_slice %343 {offsets = [0, 32], sizes = [8, 32], strides = [1, 1]} : vector<8x96xf32> to vector<8x32xf32>
    %355 = vector.extract_strided_slice %337 {offsets = [0, 32], sizes = [8, 32], strides = [1, 1]} : vector<8x192xf32> to vector<8x32xf32>
    %356 = arith.addf %354, %355 : vector<8x32xf32>
    %357 = arith.negf %356 : vector<8x32xf32>
    %358 = math.exp %357 : vector<8x32xf32>
    %cst_101 = arith.constant 1.000000e+00 : f32
    %359 = vector.broadcast %cst_101 : f32 to vector<8x32xf32>
    %360 = arith.addf %359, %358 : vector<8x32xf32>
    %361 = arith.divf %359, %360 : vector<8x32xf32>
    %362 = vector.extract_strided_slice %343 {offsets = [0, 64], sizes = [8, 32], strides = [1, 1]} : vector<8x96xf32> to vector<8x32xf32>
    %363 = vector.extract_strided_slice %337 {offsets = [0, 64], sizes = [8, 32], strides = [1, 1]} : vector<8x192xf32> to vector<8x32xf32>
    %364 = arith.mulf %353, %363 : vector<8x32xf32>
    %365 = arith.addf %362, %364 : vector<8x32xf32>
    %366 = math.tanh %365 : vector<8x32xf32>
    %cst_102 = arith.constant 1.000000e+00 : f32
    %367 = vector.broadcast %cst_102 : f32 to vector<8x32xf32>
    %368 = arith.subf %367, %361 : vector<8x32xf32>
    %369 = arith.mulf %368, %366 : vector<8x32xf32>
    %370 = arith.mulf %361, %298 : vector<8x32xf32>
    %371 = arith.addf %369, %370 : vector<8x32xf32>
    %372 = vector.extract_strided_slice %345 {offsets = [0, 0], sizes = [8, 32], strides = [1, 1]} : vector<8x96xf32> to vector<8x32xf32>
    %373 = vector.extract_strided_slice %337 {offsets = [0, 96], sizes = [8, 32], strides = [1, 1]} : vector<8x192xf32> to vector<8x32xf32>
    %374 = arith.addf %372, %373 : vector<8x32xf32>
    %375 = arith.negf %374 : vector<8x32xf32>
    %376 = math.exp %375 : vector<8x32xf32>
    %cst_103 = arith.constant 1.000000e+00 : f32
    %377 = vector.broadcast %cst_103 : f32 to vector<8x32xf32>
    %378 = arith.addf %377, %376 : vector<8x32xf32>
    %379 = arith.divf %377, %378 : vector<8x32xf32>
    %380 = vector.extract_strided_slice %345 {offsets = [0, 32], sizes = [8, 32], strides = [1, 1]} : vector<8x96xf32> to vector<8x32xf32>
    %381 = vector.extract_strided_slice %337 {offsets = [0, 128], sizes = [8, 32], strides = [1, 1]} : vector<8x192xf32> to vector<8x32xf32>
    %382 = arith.addf %380, %381 : vector<8x32xf32>
    %383 = arith.negf %382 : vector<8x32xf32>
    %384 = math.exp %383 : vector<8x32xf32>
    %cst_104 = arith.constant 1.000000e+00 : f32
    %385 = vector.broadcast %cst_104 : f32 to vector<8x32xf32>
    %386 = arith.addf %385, %384 : vector<8x32xf32>
    %387 = arith.divf %385, %386 : vector<8x32xf32>
    %388 = vector.extract_strided_slice %345 {offsets = [0, 64], sizes = [8, 32], strides = [1, 1]} : vector<8x96xf32> to vector<8x32xf32>
    %389 = vector.extract_strided_slice %337 {offsets = [0, 160], sizes = [8, 32], strides = [1, 1]} : vector<8x192xf32> to vector<8x32xf32>
    %390 = arith.mulf %379, %389 : vector<8x32xf32>
    %391 = arith.addf %388, %390 : vector<8x32xf32>
    %392 = math.tanh %391 : vector<8x32xf32>
    %cst_105 = arith.constant 1.000000e+00 : f32
    %393 = vector.broadcast %cst_105 : f32 to vector<8x32xf32>
    %394 = arith.subf %393, %387 : vector<8x32xf32>
    %395 = arith.mulf %394, %392 : vector<8x32xf32>
    %396 = arith.mulf %387, %324 : vector<8x32xf32>
    %397 = arith.addf %395, %396 : vector<8x32xf32>
    %398 = arith.index_cast %c4_i32_93 : i32 to index
    %c0_106 = arith.constant 0 : index
    %c0_107 = arith.constant 0 : index
    %399 = vector.load %arg6[%398, %c0_106, %c0_107] : memref<5x8x64xf32, #tpu.memory_space<vmem>>, vector<1x8x32xf32>
    %400 = vector.shape_cast %399 : vector<1x8x32xf32> to vector<8x32xf32>
    %401 = vector.shape_cast %371 : vector<8x32xf32> to vector<1x8x32xf32>
    tpu.vector_store %arg6[%398, %c0_106, %c0_107], %401 {strides = array<i32>} : memref<5x8x64xf32, #tpu.memory_space<vmem>>, vector<1x8x32xf32>,
    %402 = arith.index_cast %333 : i32 to index
    %c0_108 = arith.constant 0 : index
    %c32_109 = arith.constant 32 : index
    %403 = vector.load %arg6[%402, %c0_108, %c32_109] : memref<5x8x64xf32, #tpu.memory_space<vmem>>, vector<1x8x32xf32>
    %404 = vector.shape_cast %403 : vector<1x8x32xf32> to vector<8x32xf32>
    %405 = vector.shape_cast %397 : vector<8x32xf32> to vector<1x8x32xf32>
    tpu.vector_store %arg6[%402, %c0_108, %c32_109], %405 {strides = array<i32>} : memref<5x8x64xf32, #tpu.memory_space<vmem>>, vector<1x8x32xf32>,
    %c5_i32_110 = arith.constant 5 : i32
    return
  }
  func.func @transform_0(%arg0: i32) -> (i32, i32, i32) {
    %c0_i32 = arith.constant 0 : i32
    %c0_i32_0 = arith.constant 0 : i32
    %c0_i32_1 = arith.constant 0 : i32
    return %c0_i32, %arg0, %c0_i32_0 : i32, i32, i32
  }
  func.func @transform_1(%arg0: i32) -> (i32, i32) {
    %c0_i32 = arith.constant 0 : i32
    %c0_i32_0 = arith.constant 0 : i32
    %c0_i32_1 = arith.constant 0 : i32
    return %c0_i32, %c0_i32_0 : i32, i32
  }
  func.func @transform_2(%arg0: i32) -> (i32, i32) {
    %c0_i32 = arith.constant 0 : i32
    %c0_i32_0 = arith.constant 0 : i32
    %c0_i32_1 = arith.constant 0 : i32
    return %c0_i32, %c0_i32_0 : i32, i32
  }
  func.func @transform_3(%arg0: i32) -> (i32, i32) {
    %c0_i32 = arith.constant 0 : i32
    %c0_i32_0 = arith.constant 0 : i32
    %c0_i32_1 = arith.constant 0 : i32
    return %c0_i32, %c0_i32_0 : i32, i32
  }
  func.func @transform_4(%arg0: i32) -> (i32, i32) {
    %c0_i32 = arith.constant 0 : i32
    %c0_i32_0 = arith.constant 0 : i32
    %c0_i32_1 = arith.constant 0 : i32
    return %c0_i32, %c0_i32_0 : i32, i32
  }
  func.func @transform_5(%arg0: i32) -> (i32, i32, i32) {
    %c0_i32 = arith.constant 0 : i32
    %c0_i32_0 = arith.constant 0 : i32
    %c0_i32_1 = arith.constant 0 : i32
    return %c0_i32, %arg0, %c0_i32_0 : i32, i32, i32
  }
}

</mosaic_0001>

<llo_original>
// kernel: tpu_custom_call.1
$region0: #{tpu_custom_call.1}
  #allocation0 [shape = 'u32[]', space=smem, size = 0x4, offset = 0x4, fixed_abs, tag = 'smem constant byte address 0x4 - core index']
  #allocation1 [shape = 'u32[144,128]{1,0:T(1,128)}', space=vmem, size = 0x12000, scoped, tag = 'internal scratch']
  #allocation2 [shape = 'f32[40,96]{1,0:T(8,128)}', space=vmem, size = 0x5000, scoped, tag = 'scratch operand']
  #allocation3 [shape = 'f32[40,96]{1,0:T(8,128)}', space=vmem, size = 0x5000, scoped, tag = 'scratch operand']
  %s0 = inlined_call_operand.hbm [shape: f32[5,8,32], index: 0, kind: input, shape index: {}]
  %s1 = inlined_call_operand.vmem [shape: f32[1,32], index: 1, kind: input, shape index: {}]
  %s2 = inlined_call_operand.hbm [shape: bf16[32,192], index: 2, kind: input, shape index: {}]
  %s3 = inlined_call_operand.hbm [shape: f32[64,192], index: 3, kind: input, shape index: {}]
  %s4 = inlined_call_operand.vmem [shape: f32[2,192], index: 4, kind: input, shape index: {}]
  %s5 = inlined_call_operand.hbm [shape: f32[5,8,64], index: 5, kind: output, shape index: {}]
  %s6 = sld [smem:[#allocation0]]
  $region42: #{tpu_custom_call.1} parent=0
    _
  %s8 = ssub.s32 1, %s6
  %s9 = scalar_select 0, %s8, %s6
  $region1: #{tpu_custom_call.1} parent=0
    #allocation4 [shape = 'u8[20480]{0}', space=vmem, size = 0x5000, scoped, tag = 'input window, operand 0, single buffered']
    #allocation5 [shape = 's32[1]{0}', space=sflag, size = 0x4, scoped, tag = 'scoped memory for tpu_custom_call.1']
    #allocation6 [shape = 's32[1]{0}', space=sflag, size = 0x4, scoped, tag = 'scoped memory for tpu_custom_call.1']
    #allocation7 [shape = 'u8[16384]{0}', space=vmem, size = 0x4000, scoped, tag = 'input window, operand 2, single buffered']
    #allocation8 [shape = 's32[1]{0}', space=sflag, size = 0x4, scoped, tag = 'scoped memory for tpu_custom_call.1']
    #allocation9 [shape = 'u8[65536]{0}', space=vmem, size = 0x10000, scoped, tag = 'input window, operand 3, single buffered']
    #allocation10 [shape = 'u8[20480]{0}', space=vmem, size = 0x5000, scoped, tag = 'output window, operand 0, single buffered']
    %10 = vsyncpa [#allocation5], 0
    %11 = vsyncpa [#allocation8], 0
    %12 = vsyncpa [#allocation6], 0
    // Predicated region
    $region2: #{tpu_custom_call.1} parent=1 // pred_check
      _
    $region3: #{tpu_custom_call.1} parent=1 // pred_check_branch
      %14 = sbr.rel (0) target = $region5
    $region4: #{tpu_custom_call.1} parent=1 // pred_region
      %s16 = ssub.s32 640, 640
      %17 = vsyncadd [#allocation5], %s16
      %s18 = sshll.u32 [#allocation4], 4
      %s19 = int_to_ptr.vmem [resolvable:$true] %s18
      %24 = dma.hbm_to_vmem [thread:$0]  %s0, 640, %s19, [#allocation5], 128, 128, 8
    $region5: #{tpu_custom_call.1} parent=1 // pred_fallthru
      _
    // Predicated region
    $region6: #{tpu_custom_call.1} parent=1 // pred_check
      _
    $region7: #{tpu_custom_call.1} parent=1 // pred_check_branch
      %26 = sbr.rel (0) target = $region9
    $region8: #{tpu_custom_call.1} parent=1 // pred_region
      _
    $region9: #{tpu_custom_call.1} parent=1 // pred_fallthru
      _
    // Predicated region
    $region10: #{tpu_custom_call.1} parent=1 // pred_check
      _
    $region11: #{tpu_custom_call.1} parent=1 // pred_check_branch
      %28 = sbr.rel (0) target = $region13
    $region12: #{tpu_custom_call.1} parent=1 // pred_region
      %s30 = ssub.s32 512, 512
      %31 = vsyncadd [#allocation8], %s30
      %s32 = sshll.u32 [#allocation7], 4
      %s33 = int_to_ptr.vmem [resolvable:$true] %s32
      %38 = dma.hbm_to_vmem [thread:$0]  %s2, 512, %s33, [#allocation8], 128, 128, 8
    $region13: #{tpu_custom_call.1} parent=1 // pred_fallthru
      _
    // Predicated region
    $region14: #{tpu_custom_call.1} parent=1 // pred_check
      _
    $region15: #{tpu_custom_call.1} parent=1 // pred_check_branch
      %40 = sbr.rel (0) target = $region17
    $region16: #{tpu_custom_call.1} parent=1 // pred_region
      %s42 = ssub.s32 2048, 2048
      %43 = vsyncadd [#allocation8], %s42
      %s44 = sshll.u32 [#allocation9], 4
      %s45 = int_to_ptr.vmem [resolvable:$true] %s44
      %50 = dma.hbm_to_vmem [thread:$0]  %s3, 2048, %s45, [#allocation8], 256, 256, 16
    $region17: #{tpu_custom_call.1} parent=1 // pred_fallthru
      _
    // Predicated region
    $region18: #{tpu_custom_call.1} parent=1 // pred_check
      _
    $region19: #{tpu_custom_call.1} parent=1 // pred_check_branch
      %52 = sbr.rel (0) target = $region21
    $region20: #{tpu_custom_call.1} parent=1 // pred_region
      _
    $region21: #{tpu_custom_call.1} parent=1 // pred_fallthru
      _
    // Predicated region
    $region22: #{tpu_custom_call.1} parent=1 // pred_check
      _
    $region23: #{tpu_custom_call.1} parent=1 // pred_check_branch
      %54 = sbr.rel (0) target = $region25
    $region24: #{tpu_custom_call.1} parent=1 // pred_region
      %55 = dma.done [#allocation5], 640
    $region25: #{tpu_custom_call.1} parent=1 // pred_fallthru
      _
    // Predicated region
    $region26: #{tpu_custom_call.1} parent=1 // pred_check
      _
    $region27: #{tpu_custom_call.1} parent=1 // pred_check_branch
      %57 = sbr.rel (0) target = $region29
    $region28: #{tpu_custom_call.1} parent=1 // pred_region
      %58 = dma.done [#allocation8], 512
    $region29: #{tpu_custom_call.1} parent=1 // pred_fallthru
      _
    // Predicated region
    $region30: #{tpu_custom_call.1} parent=1 // pred_check
      _
    $region31: #{tpu_custom_call.1} parent=1 // pred_check_branch
      %60 = sbr.rel (0) target = $region33
    $region32: #{tpu_custom_call.1} parent=1 // pred_region
      %61 = dma.done [#allocation8], 2048
    $region33: #{tpu_custom_call.1} parent=1 // pred_fallthru
      _
    %v63 = vld [vmem:[#allocation4] sm:$0xff]
    %v64 = vld [vmem:[#allocation4 + $0x8] sm:$0xff]
    %v65 = vld [vmem:[#allocation4 + $0x10] sm:$0xff]
    %v66 = vld [vmem:[#allocation4 + $0x18] sm:$0xff]
    %v67 = vld [vmem:[#allocation4 + $0x20] sm:$0xff]
    %v68 = vld [vmem:[%s1] sm:$0x1]
    %v70 = vlaneseq
    %v71 = vshrl.u32 %v70, 7
    %v72 = vsub.s32 0, %v71
    %v73 = vrot.slane %v68, %v72
    %v75 = vadd.f32 %v63, %v73
    %v76 = vadd.f32 %v64, %v73
    %v77 = vadd.f32 %v65, %v73
    %v78 = vadd.f32 %v66, %v73
    %v79 = vadd.f32 %v67, %v73
    %v80 = vmax.f32 %v75, 0.0
    %v81 = vmax.f32 %v76, 0.0
    %v82 = vmax.f32 %v77, 0.0
    %v83 = vmax.f32 %v78, 0.0
    %v84 = vmax.f32 %v79, 0.0
    %v85 = vpack.c.bf16 %v81, %v80
    %v86 = vpack.c.bf16 %v83, %v82
    %v87 = vpack.c.bf16 %v84, %v84
    %v88 = vld [vmem:[#allocation7] sm:$0xff]
    %v89 = vld [vmem:[#allocation7 + $0x8] sm:$0xff]
    %v90 = vld [vmem:[#allocation7 + $0x10] sm:$0xff]
    %v91 = vld [vmem:[#allocation7 + $0x18] sm:$0xff]
    %v92 = vld [vmem:[%s4] ss:$2 sm:$0x3]
    %v94 = vlaneseq
    %v95 = vshrl.u32 %v94, 7
    %v96 = vsub.s32 0, %v95
    %v97 = vrot.slane %v92, %v96
    %v98 = vlaneseq
    %v99 = vshrl.u32 %v98, 7
    %v100 = vsub.s32 1, %v99
    %v101 = vrot.slane %v92, %v100
    %v108 = vunpack.c.l.b16 %v88
    %v109 = vunpack.c.h.b16 %v88
    %v110 = vunpack.c.l.b16 %v89
    %v111 = vunpack.c.h.b16 %v89
    %v112 = vunpack.c.l.b16 %v90
    %v113 = vunpack.c.h.b16 %v90
    %v114 = vunpack.c.l.b16 %v91
    %v115 = vunpack.c.h.b16 %v91
    %v116 = vpack.c.b16 %v110, %v108
    %v117 = vpack.c.b16 %v111, %v109
    %v118 = vpack.c.b16 %v114, %v112
    %v119 = vpack.c.b16 %v115, %v113
    %vm124 = vcmask 261120
    %v126 = vsel %vm124, %v85, 0
    %v129 = vsel %vm124, %v86, 0
    %v132 = vsel %vm124, %v87, 0
    %134 = vmatprep.subr.bf16.mxu0 0
    %135 = vmatpush1.bf16.msra.mxu0 0
    %136 = vmatprep.subr.bf16.mxu0 0
    %137 = vmatpush1.bf16.msra.mxu0 0
    %138 = vmatprep.subr.bf16.mxu0 0
    %139 = vmatpush1.bf16.msra.mxu0 0
    %140 = vmatprep.subr.bf16.mxu0 0
    %141 = vmatpush1.bf16.msra.mxu0 0
    %142 = vmatprep.subr.bf16.mxu0 0
    %143 = vmatpush1.bf16.msra.mxu0 0
    %144 = vmatprep.subr.bf16.mxu0 0
    %145 = vmatpush1.bf16.msra.mxu0 0
    %146 = vmatprep.subr.bf16.mxu0 %v119
    %147 = vmatpush1.bf16.msra.mxu0 %v118
    %148 = vmatprep.subr.bf16.mxu0 %v117
    %149 = vmatpush1.bf16.msra.mxu0 %v116
    %150 = vmatprep.subr.bf16.mxu0 0
    %151 = vmatpush2.bf16.msra.mxu0 0
    %152 = vmatprep.subr.bf16.mxu0 0
    %153 = vmatpush2.bf16.msra.mxu0 0
    %154 = vmatprep.subr.bf16.mxu0 0
    %155 = vmatpush2.bf16.msra.mxu0 0
    %156 = vmatprep.subr.bf16.mxu0 0
    %157 = vmatpush2.bf16.msra.mxu0 0
    %158 = vmatprep.subr.bf16.mxu0 0
    %159 = vmatpush2.bf16.msra.mxu0 0
    %160 = vmatprep.subr.bf16.mxu0 0
    %161 = vmatpush2.bf16.msra.mxu0 0
    %162 = vmatprep.subr.bf16.mxu0 0
    %163 = vmatpush2.bf16.msra.mxu0 0
    %164 = vmatprep.subr.bf16.mxu0 0
    %165 = vmatpush2.bf16.msra.mxu0 0
    %166 = vmatprep.mubr.bf16.mxu0 0
    %167 = vmatmul.mubr.bf16.gmra.mxu0 %v126
    %v168 = vpop.f32.mrf.mxu0
    %v169 = vadd.f32 %v97, %v168
    %v170 = vpop.f32.mrf.mxu0
    %v171 = vadd.f32 %v101, %v170
    %v172 = vpop.f32.mrf.mxu0
    %v173 = vadd.f32 %v97, %v172
    %v174 = vpop.f32.mrf.mxu0
    %v175 = vadd.f32 %v101, %v174
    %176 = vmatprep.mubr.bf16.mxu0 0
    %177 = vmatmul.mubr.bf16.gmra.mxu0 %v129
    %v178 = vpop.f32.mrf.mxu0
    %v179 = vadd.f32 %v97, %v178
    %v180 = vpop.f32.mrf.mxu0
    %v181 = vadd.f32 %v101, %v180
    %v182 = vpop.f32.mrf.mxu0
    %v183 = vadd.f32 %v97, %v182
    %v184 = vpop.f32.mrf.mxu0
    %v185 = vadd.f32 %v101, %v184
    %186 = vmatprep.mubr.bf16.mxu0 0
    %187 = vmatmul.mubr.bf16.gmra.mxu0 %v132
    %v188 = vpop.f32.mrf.mxu0
    %v189 = vadd.f32 %v97, %v188
    %v190 = vpop.f32.mrf.mxu0
    %v191 = vadd.f32 %v101, %v190
    %v192 = vpop.f32.mrf.mxu0
    %v193 = vpop.f32.mrf.mxu0
    %194 = vdwg.mxu0
    %vm195 = vcmask 785408
    %196 = vst.msk [vmem:[#allocation2] sm:$0xff] %vm195, %v169
    %197 = vst.msk [vmem:[#allocation2 + $0x8] sm:$0xff] %vm195, %v173
    %198 = vst.msk [vmem:[#allocation2 + $0x10] sm:$0xff] %vm195, %v179
    %199 = vst.msk [vmem:[#allocation2 + $0x18] sm:$0xff] %vm195, %v183
    %200 = vst.msk [vmem:[#allocation2 + $0x20] sm:$0xff] %vm195, %v189
    %211 = vrot.lane.b32.xlu0 %v169, 32
    %v212 = vpop.permute.xlu0 %211
    %213 = vrot.lane.b32.xlu0 %v171, 32
    %v214 = vpop.permute.xlu0 %213
    %215 = vrot.lane.b32.xlu0 %v173, 32
    %v216 = vpop.permute.xlu0 %215
    %217 = vrot.lane.b32.xlu0 %v175, 32
    %v218 = vpop.permute.xlu0 %217
    %219 = vrot.lane.b32.xlu0 %v179, 32
    %v220 = vpop.permute.xlu0 %219
    %221 = vrot.lane.b32.xlu0 %v181, 32
    %v222 = vpop.permute.xlu0 %221
    %223 = vrot.lane.b32.xlu0 %v183, 32
    %v224 = vpop.permute.xlu0 %223
    %225 = vrot.lane.b32.xlu0 %v185, 32
    %v226 = vpop.permute.xlu0 %225
    %227 = vrot.lane.b32.xlu0 %v189, 32
    %v228 = vpop.permute.xlu0 %227
    %229 = vrot.lane.b32.xlu0 %v191, 32
    %v230 = vpop.permute.xlu0 %229
    %v231 = vsel %vm124, %v212, %v214
    %v232 = vsel %vm124, %v216, %v218
    %v233 = vsel %vm124, %v220, %v222
    %v234 = vsel %vm124, %v224, %v226
    %v235 = vsel %vm124, %v228, %v230
    %241 = vst.msk [vmem:[#allocation3] sm:$0xff] %vm195, %v231
    %242 = vst.msk [vmem:[#allocation3 + $0x8] sm:$0xff] %vm195, %v232
    %243 = vst.msk [vmem:[#allocation3 + $0x10] sm:$0xff] %vm195, %v233
    %244 = vst.msk [vmem:[#allocation3 + $0x18] sm:$0xff] %vm195, %v234
    %245 = vst.msk [vmem:[#allocation3 + $0x20] sm:$0xff] %vm195, %v235
    %v246 = vld [vmem:[#allocation4] sm:$0xff]
    %v247 = vmax.f32 %v246, -1e+30
    %s248 = scalar_lea.vmem [#allocation4], 8
    %v249 = vld [vmem:[%s248] sm:$0xff]
    %v250 = vmax.f32 %v247, %v249
    %s251 = scalar_lea.vmem [#allocation4], 16
    %v252 = vld [vmem:[%s251] sm:$0xff]
    %v253 = vmax.f32 %v250, %v252
    %s254 = scalar_lea.vmem [#allocation4], 24
    %v255 = vld [vmem:[%s254] sm:$0xff]
    %v256 = vmax.f32 %v253, %v255
    %s257 = scalar_lea.vmem [#allocation4], 32
    %v258 = vld [vmem:[%s257] sm:$0xff]
    %v259 = vmax.f32 %v256, %v258
    %v260 = vld [vmem:[#allocation9] sm:$0xff]
    %v261 = vld [vmem:[#allocation9 + $0x8] sm:$0xff]
    %v262 = vld [vmem:[#allocation9 + $0x10] sm:$0xff]
    %v263 = vld [vmem:[#allocation9 + $0x18] sm:$0xff]
    %v264 = vld [vmem:[#allocation9 + $0x20] sm:$0xff]
    %v265 = vld [vmem:[#allocation9 + $0x28] sm:$0xff]
    %v266 = vld [vmem:[#allocation9 + $0x30] sm:$0xff]
    %v267 = vld [vmem:[#allocation9 + $0x38] sm:$0xff]
    %v268 = vld [vmem:[#allocation9 + $0x40] sm:$0xff]
    %v269 = vld [vmem:[#allocation9 + $0x48] sm:$0xff]
    %v270 = vld [vmem:[#allocation9 + $0x50] sm:$0xff]
    %v271 = vld [vmem:[#allocation9 + $0x58] sm:$0xff]
    %v272 = vld [vmem:[#allocation9 + $0x60] sm:$0xff]
    %v273 = vld [vmem:[#allocation9 + $0x68] sm:$0xff]
    %v274 = vld [vmem:[#allocation9 + $0x70] sm:$0xff]
    %v275 = vld [vmem:[#allocation9 + $0x78] sm:$0xff]
    %s276 = scalar_lea.vmem %s4, 1
    %v277 = vld [vmem:[%s276] ss:$2 sm:$0x3]
    %279 = vrot.lane.b32.xlu0 %v259, 32
    %v280 = vpop.permute.xlu0 %279
    %v282 = vsel %vm124, %v259, %v280
    %v284 = vlaneseq
    %v285 = vshrl.u32 %v284, 7
    %v286 = vsub.s32 0, %v285
    %v287 = vrot.slane %v277, %v286
    %v288 = vlaneseq
    %v289 = vshrl.u32 %v288, 7
    %v290 = vsub.s32 1, %v289
    %v291 = vrot.slane %v277, %v290
    %vm294 = vcmask 523264
    %v296 = vsel %vm294, %v282, 0
    %298 = vmatprep.subr.mxu0 0.0
    %299 = vmatpush1.msra.mxu0 0.0
    %300 = vmatprep.subr.mxu0 0.0
    %301 = vmatpush1.msra.mxu0 0.0
    %302 = vmatprep.subr.mxu0 0.0
    %303 = vmatpush1.msra.mxu0 0.0
    %304 = vmatprep.subr.mxu0 0.0
    %305 = vmatpush1.msra.mxu0 0.0
    %306 = vmatprep.subr.mxu0 0.0
    %307 = vmatpush1.msra.mxu0 0.0
    %308 = vmatprep.subr.mxu0 0.0
    %309 = vmatpush1.msra.mxu0 0.0
    %310 = vmatprep.subr.mxu0 0.0
    %311 = vmatpush1.msra.mxu0 0.0
    %312 = vmatprep.subr.mxu0 0.0
    %313 = vmatpush1.msra.mxu0 0.0
    %314 = vmatprep.subr.mxu0 %v275
    %315 = vmatpush1.msra.mxu0 %v274
    %316 = vmatprep.subr.mxu0 %v273
    %317 = vmatpush1.msra.mxu0 %v272
    %318 = vmatprep.subr.mxu0 %v271
    %319 = vmatpush1.msra.mxu0 %v270
    %320 = vmatprep.subr.mxu0 %v269
    %321 = vmatpush1.msra.mxu0 %v268
    %322 = vmatprep.subr.mxu0 %v267
    %323 = vmatpush1.msra.mxu0 %v266
    %324 = vmatprep.subr.mxu0 %v265
    %325 = vmatpush1.msra.mxu0 %v264
    %326 = vmatprep.subr.mxu0 %v263
    %327 = vmatpush1.msra.mxu0 %v262
    %328 = vmatprep.subr.mxu0 %v261
    %329 = vmatpush1.msra.mxu0 %v260
    %330 = vmatprep.subr.mxu0 0.0
    %331 = vmatpush2.msra.mxu0 0.0
    %332 = vmatprep.subr.mxu0 0.0
    %333 = vmatpush2.msra.mxu0 0.0
    %334 = vmatprep.subr.mxu0 0.0
    %335 = vmatpush2.msra.mxu0 0.0
    %336 = vmatprep.subr.mxu0 0.0
    %337 = vmatpush2.msra.mxu0 0.0
    %338 = vmatprep.subr.mxu0 0.0
    %339 = vmatpush2.msra.mxu0 0.0
    %340 = vmatprep.subr.mxu0 0.0
    %341 = vmatpush2.msra.mxu0 0.0
    %342 = vmatprep.subr.mxu0 0.0
    %343 = vmatpush2.msra.mxu0 0.0
    %344 = vmatprep.subr.mxu0 0.0
    %345 = vmatpush2.msra.mxu0 0.0
    %346 = vmatprep.subr.mxu0 0.0
    %347 = vmatpush2.msra.mxu0 0.0
    %348 = vmatprep.subr.mxu0 0.0
    %349 = vmatpush2.msra.mxu0 0.0
    %350 = vmatprep.subr.mxu0 0.0
    %351 = vmatpush2.msra.mxu0 0.0
    %352 = vmatprep.subr.mxu0 0.0
    %353 = vmatpush2.msra.mxu0 0.0
    %354 = vmatprep.subr.mxu0 0.0
    %355 = vmatpush2.msra.mxu0 0.0
    %356 = vmatprep.subr.mxu0 0.0
    %357 = vmatpush2.msra.mxu0 0.0
    %358 = vmatprep.subr.mxu0 0.0
    %359 = vmatpush2.msra.mxu0 0.0
    %360 = vmatprep.subr.mxu0 0.0
    %361 = vmatpush2.msra.mxu0 0.0
    %362 = vmatprep.mubr.f32.mxu0 0.0
    %363 = vmatmul.mubr.f32.gmra.mxu0 %v296
    %v364 = vpop.f32.mrf.mxu0
    %v365 = vadd.f32 %v287, %v364
    %v366 = vpop.f32.mrf.mxu0
    %v367 = vadd.f32 %v291, %v366
    %368 = vdwg.mxu0
    %v369 = vld [vmem:[#allocation2] sm:$0xff]
    %s370 = scalar_lea.vmem [#allocation3], 32
    %v371 = vld [vmem:[%s370] sm:$0xff]
    %v372 = vadd.f32 %v369, %v365
    %v373 = vxor.u32 %v372, 2147483648
    %v374 = vmul.f32 %v373, 1.442695
    %v375 = vpow.pop %v374
    %v376 = vadd.f32 %v375, 1.0
    %v377 = vrcp.pop %v376
    %v378 = vmul.f32 1.0, %v377
    %380 = vrot.lane.b32.xlu0 %v365, 64
    %v381 = vpop.permute.xlu0 %380
    %v383 = vmul.f32 %v378, %v381
    %385 = vrot.lane.b32.xlu0 %v383, 64
    %v386 = vpop.permute.xlu0 %385
    %v388 = vadd.f32 %v369, %v386
    %v389 = vtanh.pop %v388
    %v390 = vsub.f32 1.0, %v378
    %392 = vrot.lane.b32.xlu0 %v389, 96
    %v393 = vpop.permute.xlu0 %392
    %v395 = vmul.f32 %v390, %v393
    %v396 = vmul.f32 %v378, %v280
    %v397 = vadd.f32 %v395, %v396
    %398 = vrot.lane.b32.xlu0 %v365, 32
    %v399 = vpop.permute.xlu0 %398
    %v401 = vadd.f32 %v371, %v399
    %v402 = vxor.u32 %v401, 2147483648
    %v403 = vmul.f32 %v402, 1.442695
    %v404 = vpow.pop %v403
    %v405 = vadd.f32 %v404, 1.0
    %v406 = vrcp.pop %v405
    %v407 = vmul.f32 1.0, %v406
    %409 = vrot.lane.b32.xlu0 %v367, 32
    %v410 = vpop.permute.xlu0 %409
    %v412 = vadd.f32 %v371, %v410
    %v413 = vxor.u32 %v412, 2147483648
    %v414 = vmul.f32 %v413, 1.442695
    %v415 = vpow.pop %v414
    %v416 = vadd.f32 %v415, 1.0
    %v417 = vrcp.pop %v416
    %v418 = vmul.f32 1.0, %v417
    %419 = vrot.lane.b32.xlu0 %v367, 96
    %v420 = vpop.permute.xlu0 %419
    %v422 = vmul.f32 %v407, %v420
    %424 = vrot.lane.b32.xlu0 %v422, 64
    %v425 = vpop.permute.xlu0 %424
    %v427 = vadd.f32 %v371, %v425
    %v428 = vtanh.pop %v427
    %v429 = vsub.f32 1.0, %v418
    %431 = vrot.lane.b32.xlu0 %v428, 96
    %v432 = vpop.permute.xlu0 %431
    %v434 = vmul.f32 %v429, %v432
    %v435 = vmul.f32 %v418, %v280
    %v436 = vadd.f32 %v434, %v435
    %438 = vrot.lane.b32.xlu0 %v397, 96
    %v439 = vpop.permute.xlu0 %438
    %441 = vst.msk [vmem:[#allocation10] sm:$0xff] %vm124, %v439
    %s442 = scalar_lea.vmem [#allocation10], 32
    %vm443 = vcmask 523520
    %444 = vst.msk [vmem:[%s442] sm:$0xff] %vm443, %v436
    %v445 = vsel %vm124, %v439, %v436
    %v447 = vsel %vm294, %v445, 0
    %449 = vmatprep.subr.mxu0 0.0
    %450 = vmatpush1.msra.mxu0 0.0
    %451 = vmatprep.subr.mxu0 0.0
    %452 = vmatpush1.msra.mxu0 0.0
    %453 = vmatprep.subr.mxu0 0.0
    %454 = vmatpush1.msra.mxu0 0.0
    %455 = vmatprep.subr.mxu0 0.0
    %456 = vmatpush1.msra.mxu0 0.0
    %457 = vmatprep.subr.mxu0 0.0
    %458 = vmatpush1.msra.mxu0 0.0
    %459 = vmatprep.subr.mxu0 0.0
    %460 = vmatpush1.msra.mxu0 0.0
    %461 = vmatprep.subr.mxu0 0.0
    %462 = vmatpush1.msra.mxu0 0.0
    %463 = vmatprep.subr.mxu0 0.0
    %464 = vmatpush1.msra.mxu0 0.0
    %465 = vmatprep.subr.mxu0 %v275
    %466 = vmatpush1.msra.mxu0 %v274
    %467 = vmatprep.subr.mxu0 %v273
    %468 = vmatpush1.msra.mxu0 %v272
    %469 = vmatprep.subr.mxu0 %v271
    %470 = vmatpush1.msra.mxu0 %v270
    %471 = vmatprep.subr.mxu0 %v269
    %472 = vmatpush1.msra.mxu0 %v268
    %473 = vmatprep.subr.mxu0 %v267
    %474 = vmatpush1.msra.mxu0 %v266
    %475 = vmatprep.subr.mxu0 %v265
    %476 = vmatpush1.msra.mxu0 %v264
    %477 = vmatprep.subr.mxu0 %v263
    %478 = vmatpush1.msra.mxu0 %v262
    %479 = vmatprep.subr.mxu0 %v261
    %480 = vmatpush1.msra.mxu0 %v260
    %481 = vmatprep.subr.mxu0 0.0
    %482 = vmatpush2.msra.mxu0 0.0
    %483 = vmatprep.subr.mxu0 0.0
    %484 = vmatpush2.msra.mxu0 0.0
    %485 = vmatprep.subr.mxu0 0.0
    %486 = vmatpush2.msra.mxu0 0.0
    %487 = vmatprep.subr.mxu0 0.0
    %488 = vmatpush2.msra.mxu0 0.0
    %489 = vmatprep.subr.mxu0 0.0
    %490 = vmatpush2.msra.mxu0 0.0
    %491 = vmatprep.subr.mxu0 0.0
    %492 = vmatpush2.msra.mxu0 0.0
    %493 = vmatprep.subr.mxu0 0.0
    %494 = vmatpush2.msra.mxu0 0.0
    %495 = vmatprep.subr.mxu0 0.0
    %496 = vmatpush2.msra.mxu0 0.0
    %497 = vmatprep.subr.mxu0 0.0
    %498 = vmatpush2.msra.mxu0 0.0
    %499 = vmatprep.subr.mxu0 0.0
    %500 = vmatpush2.msra.mxu0 0.0
    %501 = vmatprep.subr.mxu0 0.0
    %502 = vmatpush2.msra.mxu0 0.0
    %503 = vmatprep.subr.mxu0 0.0
    %504 = vmatpush2.msra.mxu0 0.0
    %505 = vmatprep.subr.mxu0 0.0
    %506 = vmatpush2.msra.mxu0 0.0
    %507 = vmatprep.subr.mxu0 0.0
    %508 = vmatpush2.msra.mxu0 0.0
    %509 = vmatprep.subr.mxu0 0.0
    %510 = vmatpush2.msra.mxu0 0.0
    %511 = vmatprep.subr.mxu0 0.0
    %512 = vmatpush2.msra.mxu0 0.0
    %513 = vmatprep.mubr.f32.mxu0 0.0
    %514 = vmatmul.mubr.f32.gmra.mxu0 %v447
    %v515 = vpop.f32.mrf.mxu0
    %v516 = vadd.f32 %v287, %v515
    %v517 = vpop.f32.mrf.mxu0
    %v518 = vadd.f32 %v291, %v517
    %519 = vdwg.mxu0
    %s520 = scalar_lea.vmem [#allocation2], 8
    %v521 = vld [vmem:[%s520] sm:$0xff]
    %s522 = scalar_lea.vmem [#allocation3], 24
    %v523 = vld [vmem:[%s522] sm:$0xff]
    %v524 = vadd.f32 %v521, %v516
    %v525 = vxor.u32 %v524, 2147483648
    %v526 = vmul.f32 %v525, 1.442695
    %v527 = vpow.pop %v526
    %v528 = vadd.f32 %v527, 1.0
    %v529 = vrcp.pop %v528
    %v530 = vmul.f32 1.0, %v529
    %532 = vrot.lane.b32.xlu0 %v516, 64
    %v533 = vpop.permute.xlu0 %532
    %v535 = vmul.f32 %v530, %v533
    %537 = vrot.lane.b32.xlu0 %v535, 64
    %v538 = vpop.permute.xlu0 %537
    %v540 = vadd.f32 %v521, %v538
    %v541 = vtanh.pop %v540
    %v542 = vsub.f32 1.0, %v530
    %544 = vrot.lane.b32.xlu0 %v541, 96
    %v545 = vpop.permute.xlu0 %544
    %v547 = vmul.f32 %v542, %v545
    %v548 = vmul.f32 %v530, %v397
    %v549 = vadd.f32 %v547, %v548
    %550 = vrot.lane.b32.xlu0 %v516, 32
    %v551 = vpop.permute.xlu0 %550
    %v553 = vadd.f32 %v523, %v551
    %v554 = vxor.u32 %v553, 2147483648
    %v555 = vmul.f32 %v554, 1.442695
    %v556 = vpow.pop %v555
    %v557 = vadd.f32 %v556, 1.0
    %v558 = vrcp.pop %v557
    %v559 = vmul.f32 1.0, %v558
    %561 = vrot.lane.b32.xlu0 %v518, 32
    %v562 = vpop.permute.xlu0 %561
    %v564 = vadd.f32 %v523, %v562
    %v565 = vxor.u32 %v564, 2147483648
    %v566 = vmul.f32 %v565, 1.442695
    %v567 = vpow.pop %v566
    %v568 = vadd.f32 %v567, 1.0
    %v569 = vrcp.pop %v568
    %v570 = vmul.f32 1.0, %v569
    %571 = vrot.lane.b32.xlu0 %v518, 96
    %v572 = vpop.permute.xlu0 %571
    %v574 = vmul.f32 %v559, %v572
    %576 = vrot.lane.b32.xlu0 %v574, 64
    %v577 = vpop.permute.xlu0 %576
    %v579 = vadd.f32 %v523, %v577
    %v580 = vtanh.pop %v579
    %v581 = vsub.f32 1.0, %v570
    %583 = vrot.lane.b32.xlu0 %v580, 96
    %v584 = vpop.permute.xlu0 %583
    %v586 = vmul.f32 %v581, %v584
    %v587 = vmul.f32 %v570, %v436
    %v588 = vadd.f32 %v586, %v587
    %590 = vrot.lane.b32.xlu0 %v549, 96
    %v591 = vpop.permute.xlu0 %590
    %s593 = scalar_lea.vmem [#allocation10], 8
    %594 = vst.msk [vmem:[%s593] sm:$0xff] %vm124, %v591
    %s595 = scalar_lea.vmem [#allocation10], 24
    %596 = vst.msk [vmem:[%s595] sm:$0xff] %vm443, %v588
    %v597 = vsel %vm124, %v591, %v588
    %v599 = vsel %vm294, %v597, 0
    %601 = vmatprep.subr.mxu0 0.0
    %602 = vmatpush1.msra.mxu0 0.0
    %603 = vmatprep.subr.mxu0 0.0
    %604 = vmatpush1.msra.mxu0 0.0
    %605 = vmatprep.subr.mxu0 0.0
    %606 = vmatpush1.msra.mxu0 0.0
    %607 = vmatprep.subr.mxu0 0.0
    %608 = vmatpush1.msra.mxu0 0.0
    %609 = vmatprep.subr.mxu0 0.0
    %610 = vmatpush1.msra.mxu0 0.0
    %611 = vmatprep.subr.mxu0 0.0
    %612 = vmatpush1.msra.mxu0 0.0
    %613 = vmatprep.subr.mxu0 0.0
    %614 = vmatpush1.msra.mxu0 0.0
    %615 = vmatprep.subr.mxu0 0.0
    %616 = vmatpush1.msra.mxu0 0.0
    %617 = vmatprep.subr.mxu0 %v275
    %618 = vmatpush1.msra.mxu0 %v274
    %619 = vmatprep.subr.mxu0 %v273
    %620 = vmatpush1.msra.mxu0 %v272
    %621 = vmatprep.subr.mxu0 %v271
    %622 = vmatpush1.msra.mxu0 %v270
    %623 = vmatprep.subr.mxu0 %v269
    %624 = vmatpush1.msra.mxu0 %v268
    %625 = vmatprep.subr.mxu0 %v267
    %626 = vmatpush1.msra.mxu0 %v266
    %627 = vmatprep.subr.mxu0 %v265
    %628 = vmatpush1.msra.mxu0 %v264
    %629 = vmatprep.subr.mxu0 %v263
    %630 = vmatpush1.msra.mxu0 %v262
    %631 = vmatprep.subr.mxu0 %v261
    %632 = vmatpush1.msra.mxu0 %v260
    %633 = vmatprep.subr.mxu0 0.0
    %634 = vmatpush2.msra.mxu0 0.0
    %635 = vmatprep.subr.mxu0 0.0
    %636 = vmatpush2.msra.mxu0 0.0
    %637 = vmatprep.subr.mxu0 0.0
    %638 = vmatpush2.msra.mxu0 0.0
    %639 = vmatprep.subr.mxu0 0.0
    %640 = vmatpush2.msra.mxu0 0.0
    %641 = vmatprep.subr.mxu0 0.0
    %642 = vmatpush2.msra.mxu0 0.0
    %643 = vmatprep.subr.mxu0 0.0
    %644 = vmatpush2.msra.mxu0 0.0
    %645 = vmatprep.subr.mxu0 0.0
    %646 = vmatpush2.msra.mxu0 0.0
    %647 = vmatprep.subr.mxu0 0.0
    %648 = vmatpush2.msra.mxu0 0.0
    %649 = vmatprep.subr.mxu0 0.0
    %650 = vmatpush2.msra.mxu0 0.0
    %651 = vmatprep.subr.mxu0 0.0
    %652 = vmatpush2.msra.mxu0 0.0
    %653 = vmatprep.subr.mxu0 0.0
    %654 = vmatpush2.msra.mxu0 0.0
    %655 = vmatprep.subr.mxu0 0.0
    %656 = vmatpush2.msra.mxu0 0.0
    %657 = vmatprep.subr.mxu0 0.0
    %658 = vmatpush2.msra.mxu0 0.0
    %659 = vmatprep.subr.mxu0 0.0
    %660 = vmatpush2.msra.mxu0 0.0
    %661 = vmatprep.subr.mxu0 0.0
    %662 = vmatpush2.msra.mxu0 0.0
    %663 = vmatprep.subr.mxu0 0.0
    %664 = vmatpush2.msra.mxu0 0.0
    %665 = vmatprep.mubr.f32.mxu0 0.0
    %666 = vmatmul.mubr.f32.gmra.mxu0 %v599
    %v667 = vpop.f32.mrf.mxu0
    %v668 = vadd.f32 %v287, %v667
    %v669 = vpop.f32.mrf.mxu0
    %v670 = vadd.f32 %v291, %v669
    %671 = vdwg.mxu0
    %s672 = scalar_lea.vmem [#allocation2], 16
    %v673 = vld [vmem:[%s672] sm:$0xff]
    %s674 = scalar_lea.vmem [#allocation3], 16
    %v675 = vld [vmem:[%s674] sm:$0xff]
    %v676 = vadd.f32 %v673, %v668
    %v677 = vxor.u32 %v676, 2147483648
    %v678 = vmul.f32 %v677, 1.442695
    %v679 = vpow.pop %v678
    %v680 = vadd.f32 %v679, 1.0
    %v681 = vrcp.pop %v680
    %v682 = vmul.f32 1.0, %v681
    %684 = vrot.lane.b32.xlu0 %v668, 64
    %v685 = vpop.permute.xlu0 %684
    %v687 = vmul.f32 %v682, %v685
    %689 = vrot.lane.b32.xlu0 %v687, 64
    %v690 = vpop.permute.xlu0 %689
    %v692 = vadd.f32 %v673, %v690
    %v693 = vtanh.pop %v692
    %v694 = vsub.f32 1.0, %v682
    %696 = vrot.lane.b32.xlu0 %v693, 96
    %v697 = vpop.permute.xlu0 %696
    %v699 = vmul.f32 %v694, %v697
    %v700 = vmul.f32 %v682, %v549
    %v701 = vadd.f32 %v699, %v700
    %702 = vrot.lane.b32.xlu0 %v668, 32
    %v703 = vpop.permute.xlu0 %702
    %v705 = vadd.f32 %v675, %v703
    %v706 = vxor.u32 %v705, 2147483648
    %v707 = vmul.f32 %v706, 1.442695
    %v708 = vpow.pop %v707
    %v709 = vadd.f32 %v708, 1.0
    %v710 = vrcp.pop %v709
    %v711 = vmul.f32 1.0, %v710
    %713 = vrot.lane.b32.xlu0 %v670, 32
    %v714 = vpop.permute.xlu0 %713
    %v716 = vadd.f32 %v675, %v714
    %v717 = vxor.u32 %v716, 2147483648
    %v718 = vmul.f32 %v717, 1.442695
    %v719 = vpow.pop %v718
    %v720 = vadd.f32 %v719, 1.0
    %v721 = vrcp.pop %v720
    %v722 = vmul.f32 1.0, %v721
    %723 = vrot.lane.b32.xlu0 %v670, 96
    %v724 = vpop.permute.xlu0 %723
    %v726 = vmul.f32 %v711, %v724
    %728 = vrot.lane.b32.xlu0 %v726, 64
    %v729 = vpop.permute.xlu0 %728
    %v731 = vadd.f32 %v675, %v729
    %v732 = vtanh.pop %v731
    %v733 = vsub.f32 1.0, %v722
    %735 = vrot.lane.b32.xlu0 %v732, 96
    %v736 = vpop.permute.xlu0 %735
    %v738 = vmul.f32 %v733, %v736
    %v739 = vmul.f32 %v722, %v588
    %v740 = vadd.f32 %v738, %v739
    %742 = vrot.lane.b32.xlu0 %v701, 96
    %v743 = vpop.permute.xlu0 %742
    %s745 = scalar_lea.vmem [#allocation10], 16
    %746 = vst.msk [vmem:[%s745] sm:$0xff] %vm124, %v743
    %747 = vst.msk [vmem:[%s745] sm:$0xff] %vm443, %v740
    %v748 = vsel %vm124, %v743, %v740
    %v750 = vsel %vm294, %v748, 0
    %752 = vmatprep.subr.mxu0 0.0
    %753 = vmatpush1.msra.mxu0 0.0
    %754 = vmatprep.subr.mxu0 0.0
    %755 = vmatpush1.msra.mxu0 0.0
    %756 = vmatprep.subr.mxu0 0.0
    %757 = vmatpush1.msra.mxu0 0.0
    %758 = vmatprep.subr.mxu0 0.0
    %759 = vmatpush1.msra.mxu0 0.0
    %760 = vmatprep.subr.mxu0 0.0
    %761 = vmatpush1.msra.mxu0 0.0
    %762 = vmatprep.subr.mxu0 0.0
    %763 = vmatpush1.msra.mxu0 0.0
    %764 = vmatprep.subr.mxu0 0.0
    %765 = vmatpush1.msra.mxu0 0.0
    %766 = vmatprep.subr.mxu0 0.0
    %767 = vmatpush1.msra.mxu0 0.0
    %768 = vmatprep.subr.mxu0 %v275
    %769 = vmatpush1.msra.mxu0 %v274
    %770 = vmatprep.subr.mxu0 %v273
    %771 = vmatpush1.msra.mxu0 %v272
    %772 = vmatprep.subr.mxu0 %v271
    %773 = vmatpush1.msra.mxu0 %v270
    %774 = vmatprep.subr.mxu0 %v269
    %775 = vmatpush1.msra.mxu0 %v268
    %776 = vmatprep.subr.mxu0 %v267
    %777 = vmatpush1.msra.mxu0 %v266
    %778 = vmatprep.subr.mxu0 %v265
    %779 = vmatpush1.msra.mxu0 %v264
    %780 = vmatprep.subr.mxu0 %v263
    %781 = vmatpush1.msra.mxu0 %v262
    %782 = vmatprep.subr.mxu0 %v261
    %783 = vmatpush1.msra.mxu0 %v260
    %784 = vmatprep.subr.mxu0 0.0
    %785 = vmatpush2.msra.mxu0 0.0
    %786 = vmatprep.subr.mxu0 0.0
    %787 = vmatpush2.msra.mxu0 0.0
    %788 = vmatprep.subr.mxu0 0.0
    %789 = vmatpush2.msra.mxu0 0.0
    %790 = vmatprep.subr.mxu0 0.0
    %791 = vmatpush2.msra.mxu0 0.0
    %792 = vmatprep.subr.mxu0 0.0
    %793 = vmatpush2.msra.mxu0 0.0
    %794 = vmatprep.subr.mxu0 0.0
    %795 = vmatpush2.msra.mxu0 0.0
    %796 = vmatprep.subr.mxu0 0.0
    %797 = vmatpush2.msra.mxu0 0.0
    %798 = vmatprep.subr.mxu0 0.0
    %799 = vmatpush2.msra.mxu0 0.0
    %800 = vmatprep.subr.mxu0 0.0
    %801 = vmatpush2.msra.mxu0 0.0
    %802 = vmatprep.subr.mxu0 0.0
    %803 = vmatpush2.msra.mxu0 0.0
    %804 = vmatprep.subr.mxu0 0.0
    %805 = vmatpush2.msra.mxu0 0.0
    %806 = vmatprep.subr.mxu0 0.0
    %807 = vmatpush2.msra.mxu0 0.0
    %808 = vmatprep.subr.mxu0 0.0
    %809 = vmatpush2.msra.mxu0 0.0
    %810 = vmatprep.subr.mxu0 0.0
    %811 = vmatpush2.msra.mxu0 0.0
    %812 = vmatprep.subr.mxu0 0.0
    %813 = vmatpush2.msra.mxu0 0.0
    %814 = vmatprep.subr.mxu0 0.0
    %815 = vmatpush2.msra.mxu0 0.0
    %816 = vmatprep.mubr.f32.mxu0 0.0
    %817 = vmatmul.mubr.f32.gmra.mxu0 %v750
    %v818 = vpop.f32.mrf.mxu0
    %v819 = vadd.f32 %v287, %v818
    %v820 = vpop.f32.mrf.mxu0
    %v821 = vadd.f32 %v291, %v820
    %822 = vdwg.mxu0
    %s823 = scalar_lea.vmem [#allocation2], 24
    %v824 = vld [vmem:[%s823] sm:$0xff]
    %s825 = scalar_lea.vmem [#allocation3], 8
    %v826 = vld [vmem:[%s825] sm:$0xff]
    %v827 = vadd.f32 %v824, %v819
    %v828 = vxor.u32 %v827, 2147483648
    %v829 = vmul.f32 %v828, 1.442695
    %v830 = vpow.pop %v829
    %v831 = vadd.f32 %v830, 1.0
    %v832 = vrcp.pop %v831
    %v833 = vmul.f32 1.0, %v832
    %835 = vrot.lane.b32.xlu0 %v819, 64
    %v836 = vpop.permute.xlu0 %835
    %v838 = vmul.f32 %v833, %v836
    %840 = vrot.lane.b32.xlu0 %v838, 64
    %v841 = vpop.permute.xlu0 %840
    %v843 = vadd.f32 %v824, %v841
    %v844 = vtanh.pop %v843
    %v845 = vsub.f32 1.0, %v833
    %847 = vrot.lane.b32.xlu0 %v844, 96
    %v848 = vpop.permute.xlu0 %847
    %v850 = vmul.f32 %v845, %v848
    %v851 = vmul.f32 %v833, %v701
    %v852 = vadd.f32 %v850, %v851
    %853 = vrot.lane.b32.xlu0 %v819, 32
    %v854 = vpop.permute.xlu0 %853
    %v856 = vadd.f32 %v826, %v854
    %v857 = vxor.u32 %v856, 2147483648
    %v858 = vmul.f32 %v857, 1.442695
    %v859 = vpow.pop %v858
    %v860 = vadd.f32 %v859, 1.0
    %v861 = vrcp.pop %v860
    %v862 = vmul.f32 1.0, %v861
    %864 = vrot.lane.b32.xlu0 %v821, 32
    %v865 = vpop.permute.xlu0 %864
    %v867 = vadd.f32 %v826, %v865
    %v868 = vxor.u32 %v867, 2147483648
    %v869 = vmul.f32 %v868, 1.442695
    %v870 = vpow.pop %v869
    %v871 = vadd.f32 %v870, 1.0
    %v872 = vrcp.pop %v871
    %v873 = vmul.f32 1.0, %v872
    %874 = vrot.lane.b32.xlu0 %v821, 96
    %v875 = vpop.permute.xlu0 %874
    %v877 = vmul.f32 %v862, %v875
    %879 = vrot.lane.b32.xlu0 %v877, 64
    %v880 = vpop.permute.xlu0 %879
    %v882 = vadd.f32 %v826, %v880
    %v883 = vtanh.pop %v882
    %v884 = vsub.f32 1.0, %v873
    %886 = vrot.lane.b32.xlu0 %v883, 96
    %v887 = vpop.permute.xlu0 %886
    %v889 = vmul.f32 %v884, %v887
    %v890 = vmul.f32 %v873, %v740
    %v891 = vadd.f32 %v889, %v890
    %893 = vrot.lane.b32.xlu0 %v852, 96
    %v894 = vpop.permute.xlu0 %893
    %896 = vst.msk [vmem:[%s595] sm:$0xff] %vm124, %v894
    %897 = vst.msk [vmem:[%s593] sm:$0xff] %vm443, %v891
    %v898 = vsel %vm124, %v894, %v891
    %v900 = vsel %vm294, %v898, 0
    %902 = vmatprep.subr.mxu0 0.0
    %903 = vmatpush1.msra.mxu0 0.0
    %904 = vmatprep.subr.mxu0 0.0
    %905 = vmatpush1.msra.mxu0 0.0
    %906 = vmatprep.subr.mxu0 0.0
    %907 = vmatpush1.msra.mxu0 0.0
    %908 = vmatprep.subr.mxu0 0.0
    %909 = vmatpush1.msra.mxu0 0.0
    %910 = vmatprep.subr.mxu0 0.0
    %911 = vmatpush1.msra.mxu0 0.0
    %912 = vmatprep.subr.mxu0 0.0
    %913 = vmatpush1.msra.mxu0 0.0
    %914 = vmatprep.subr.mxu0 0.0
    %915 = vmatpush1.msra.mxu0 0.0
    %916 = vmatprep.subr.mxu0 0.0
    %917 = vmatpush1.msra.mxu0 0.0
    %918 = vmatprep.subr.mxu0 %v275
    %919 = vmatpush1.msra.mxu0 %v274
    %920 = vmatprep.subr.mxu0 %v273
    %921 = vmatpush1.msra.mxu0 %v272
    %922 = vmatprep.subr.mxu0 %v271
    %923 = vmatpush1.msra.mxu0 %v270
    %924 = vmatprep.subr.mxu0 %v269
    %925 = vmatpush1.msra.mxu0 %v268
    %926 = vmatprep.subr.mxu0 %v267
    %927 = vmatpush1.msra.mxu0 %v266
    %928 = vmatprep.subr.mxu0 %v265
    %929 = vmatpush1.msra.mxu0 %v264
    %930 = vmatprep.subr.mxu0 %v263
    %931 = vmatpush1.msra.mxu0 %v262
    %932 = vmatprep.subr.mxu0 %v261
    %933 = vmatpush1.msra.mxu0 %v260
    %934 = vmatprep.subr.mxu0 0.0
    %935 = vmatpush2.msra.mxu0 0.0
    %936 = vmatprep.subr.mxu0 0.0
    %937 = vmatpush2.msra.mxu0 0.0
    %938 = vmatprep.subr.mxu0 0.0
    %939 = vmatpush2.msra.mxu0 0.0
    %940 = vmatprep.subr.mxu0 0.0
    %941 = vmatpush2.msra.mxu0 0.0
    %942 = vmatprep.subr.mxu0 0.0
    %943 = vmatpush2.msra.mxu0 0.0
    %944 = vmatprep.subr.mxu0 0.0
    %945 = vmatpush2.msra.mxu0 0.0
    %946 = vmatprep.subr.mxu0 0.0
    %947 = vmatpush2.msra.mxu0 0.0
    %948 = vmatprep.subr.mxu0 0.0
    %949 = vmatpush2.msra.mxu0 0.0
    %950 = vmatprep.subr.mxu0 0.0
    %951 = vmatpush2.msra.mxu0 0.0
    %952 = vmatprep.subr.mxu0 0.0
    %953 = vmatpush2.msra.mxu0 0.0
    %954 = vmatprep.subr.mxu0 0.0
    %955 = vmatpush2.msra.mxu0 0.0
    %956 = vmatprep.subr.mxu0 0.0
    %957 = vmatpush2.msra.mxu0 0.0
    %958 = vmatprep.subr.mxu0 0.0
    %959 = vmatpush2.msra.mxu0 0.0
    %960 = vmatprep.subr.mxu0 0.0
    %961 = vmatpush2.msra.mxu0 0.0
    %962 = vmatprep.subr.mxu0 0.0
    %963 = vmatpush2.msra.mxu0 0.0
    %964 = vmatprep.subr.mxu0 0.0
    %965 = vmatpush2.msra.mxu0 0.0
    %966 = vmatprep.mubr.f32.mxu0 0.0
    %967 = vmatmul.mubr.f32.gmra.mxu0 %v900
    %v968 = vpop.f32.mrf.mxu0
    %v969 = vadd.f32 %v287, %v968
    %v970 = vpop.f32.mrf.mxu0
    %v971 = vadd.f32 %v291, %v970
    %972 = vdwg.mxu0
    %s973 = scalar_lea.vmem [#allocation2], 32
    %v974 = vld [vmem:[%s973] sm:$0xff]
    %v975 = vld [vmem:[#allocation3] sm:$0xff]
    %v976 = vadd.f32 %v974, %v969
    %v977 = vxor.u32 %v976, 2147483648
    %v978 = vmul.f32 %v977, 1.442695
    %v979 = vpow.pop %v978
    %v980 = vadd.f32 %v979, 1.0
    %v981 = vrcp.pop %v980
    %v982 = vmul.f32 1.0, %v981
    %984 = vrot.lane.b32.xlu0 %v969, 64
    %v985 = vpop.permute.xlu0 %984
    %v987 = vmul.f32 %v982, %v985
    %989 = vrot.lane.b32.xlu0 %v987, 64
    %v990 = vpop.permute.xlu0 %989
    %v992 = vadd.f32 %v974, %v990
    %v993 = vtanh.pop %v992
    %v994 = vsub.f32 1.0, %v982
    %996 = vrot.lane.b32.xlu0 %v993, 96
    %v997 = vpop.permute.xlu0 %996
    %v999 = vmul.f32 %v994, %v997
    %v1000 = vmul.f32 %v982, %v852
    %v1001 = vadd.f32 %v999, %v1000
    %1002 = vrot.lane.b32.xlu0 %v969, 32
    %v1003 = vpop.permute.xlu0 %1002
    %v1005 = vadd.f32 %v975, %v1003
    %v1006 = vxor.u32 %v1005, 2147483648
    %v1007 = vmul.f32 %v1006, 1.442695
    %v1008 = vpow.pop %v1007
    %v1009 = vadd.f32 %v1008, 1.0
    %v1010 = vrcp.pop %v1009
    %v1011 = vmul.f32 1.0, %v1010
    %1013 = vrot.lane.b32.xlu0 %v971, 32
    %v1014 = vpop.permute.xlu0 %1013
    %v1016 = vadd.f32 %v975, %v1014
    %v1017 = vxor.u32 %v1016, 2147483648
    %v1018 = vmul.f32 %v1017, 1.442695
    %v1019 = vpow.pop %v1018
    %v1020 = vadd.f32 %v1019, 1.0
    %v1021 = vrcp.pop %v1020
    %v1022 = vmul.f32 1.0, %v1021
    %1023 = vrot.lane.b32.xlu0 %v971, 96
    %v1024 = vpop.permute.xlu0 %1023
    %v1026 = vmul.f32 %v1011, %v1024
    %1028 = vrot.lane.b32.xlu0 %v1026, 64
    %v1029 = vpop.permute.xlu0 %1028
    %v1031 = vadd.f32 %v975, %v1029
    %v1032 = vtanh.pop %v1031
    %v1033 = vsub.f32 1.0, %v1022
    %1035 = vrot.lane.b32.xlu0 %v1032, 96
    %v1036 = vpop.permute.xlu0 %1035
    %v1038 = vmul.f32 %v1033, %v1036
    %v1039 = vmul.f32 %v1022, %v891
    %v1040 = vadd.f32 %v1038, %v1039
    %1042 = vrot.lane.b32.xlu0 %v1001, 96
    %v1043 = vpop.permute.xlu0 %1042
    %1045 = vst.msk [vmem:[%s442] sm:$0xff] %vm124, %v1043
    %1046 = vst.msk [vmem:[#allocation10] sm:$0xff] %vm443, %v1040
    // Predicated region
    $region34: #{tpu_custom_call.1} parent=1 // pred_check
      _
    $region35: #{tpu_custom_call.1} parent=1 // pred_check_branch
      %1048 = sbr.rel (0) target = $region37
    $region36: #{tpu_custom_call.1} parent=1 // pred_region
      %s1050 = ssub.s32 640, 640
      %1051 = vsyncadd [#allocation6], %s1050
      %s1052 = sshll.u32 [#allocation10], 4
      %s1053 = int_to_ptr.vmem [resolvable:$true] %s1052
      %1058 = dma.vmem_to_hbm [thread:$0]  %s1053, 640, %s5, [#allocation6], 128, 128, 8
    $region37: #{tpu_custom_call.1} parent=1 // pred_fallthru
      _
    // Predicated region
    $region38: #{tpu_custom_call.1} parent=1 // pred_check
      _
    $region39: #{tpu_custom_call.1} parent=1 // pred_check_branch
      %1060 = sbr.rel (0) target = $region41
    $region40: #{tpu_custom_call.1} parent=1 // pred_region
      %1061 = dma.done [#allocation6], 640
    $region41: #{tpu_custom_call.1} parent=1 // pred_fallthru
      _
    %1062 = vsyncpa [#allocation5], 1
    %1063 = vsyncpa [#allocation8], 1
    %1064 = vsyncpa [#allocation6], 1

</llo_original>
